<compile_context>
chip_gen: v6e
topology: v6e:2x2x1
jax: 0.10.0
libtpu: 0.0.40
codegen_flags: <defaults>
</compile_context>

<pallas_src>
import jax
import jax.numpy as jnp
from jax.experimental import pallas as pl
from jax.experimental.pallas import tpu as pltpu


def _round_up(x, m):
    return ((x + m - 1) // m) * m


# ---------------------------------------------------------------------------
# Kernel: one invocation runs the whole sequence (T and L are static).
# ---------------------------------------------------------------------------
def make_lstm_kernel(T: int, num_layers: int, B_pad: int, H: int,
                     S: int, G_pad: int, dense: bool):
    """S = padded state lane width, G_pad = padded gate lane width."""
    L = num_layers

    def kernel(*refs):
        # refs layout:
        #   [0]              x_ref    (T*B_pad, F_pad)  bf16, time-major, flattened
        #   [1 .. L]         w_ih     layer0: (F_pad, G_pad); l>=1: (S, G_pad)  bf16
        #   [1+L .. 2L]      w_hh     (S, G_pad)  bf16
        #   [1+2L .. 3L]     b        (1, G_pad)  f32   (b_ih + b_hh)
        #   [1+3L]           w_fc     (S, O_pad)  bf16
        #   [2+3L]           b_fc     (1, O_pad)  f32
        #   [3+3L]           out_ref  (B_pad, O_pad)  f32
        x_ref = refs[0]
        w_ih_refs = refs[1:1 + L]
        w_hh_refs = refs[1 + L:1 + 2 * L]
        b_refs = refs[1 + 2 * L:1 + 3 * L]
        w_fc_ref = refs[1 + 3 * L]
        b_fc_ref = refs[2 + 3 * L]
        out_ref = refs[3 + 3 * L]

        f32 = jnp.float32
        bf16 = jnp.bfloat16
        TB = T * B_pad

        # ---- Layer-0 input projection for every timestep: one batched matmul
        # off the serial recurrence (layer-0 bias folded in here). ----
        gx_all = jnp.dot(x_ref[...], w_ih_refs[0][...],
                         preferred_element_type=f32)
        gx_all = gx_all + jnp.broadcast_to(b_refs[0][...], (TB, G_pad))

        # Hoisted bias broadcasts for layers >= 1 (JAX does not CSE
        # broadcast_in_dim; keep them off the unrolled critical path).
        b_bcast = [jnp.broadcast_to(b_refs[l][...], (B_pad, G_pad))
                   for l in range(1, L)]

        if dense:
            # Lane mask selecting the live state lanes [0, H) of the 128-lane tile.
            lane = jax.lax.broadcasted_iota(jnp.int32, (B_pad, G_pad), 1)
            state_mask = lane < H

        def gate_activations(gates):
            """Return (i, f, g, o), each (B_pad, S), aligned to state lanes [0, H)."""
            if dense:
                # sigmoid(x) = 0.5*tanh(0.5x)+0.5 : one EUP pass, VALU rides free.
                sg = 0.5 * jnp.tanh(0.5 * gates) + 0.5   # i / f / o gates
                tg = jnp.tanh(gates)                      # cell (g) gate
                # Gate k sits at lanes [k*H, (k+1)*H); rotate it onto [0, H).
                i_g = jnp.where(state_mask, sg, 0.0)      # keep lanes >= H inert
                f_g = pltpu.roll(sg, G_pad - H, axis=1)
                g_g = pltpu.roll(tg, G_pad - 2 * H, axis=1)
                o_g = pltpu.roll(sg, G_pad - 3 * H, axis=1)
            else:
                # 4*H > 128: each gate occupies its own lane-tile-aligned block
                # of width S, so plain aligned slices suffice (no rolls needed).
                def sig(v):
                    return 0.5 * jnp.tanh(0.5 * v) + 0.5
                i_g = sig(gates[:, 0 * S:1 * S])
                f_g = sig(gates[:, 1 * S:2 * S])
                g_g = jnp.tanh(gates[:, 2 * S:3 * S])
                o_g = sig(gates[:, 3 * S:4 * S])
            return i_g, f_g, g_g, o_g

        # Loop-carried state. Lanes >= H (and padded batch rows) stay inert:
        # the corresponding weight rows/cols and bias entries are zero, c0 = 0,
        # and the i*g product is lane-masked in the dense path.
        h = [jnp.zeros((B_pad, S), f32) for _ in range(L)]
        c = [jnp.zeros((B_pad, S), f32) for _ in range(L)]

        # T, L are small and static -> fully unrolled so the LLO scheduler can
        # overlap MXU pushes with EUP/VPU work across timesteps and layers.
        for t in range(T):
            for l in range(L):
                rec = jnp.dot(h[l].astype(bf16), w_hh_refs[l][...],
                              preferred_element_type=f32)
                if l == 0:
                    gates = gx_all[t * B_pad:(t + 1) * B_pad, :] + rec
                else:
                    gates = (jnp.dot(h[l - 1].astype(bf16), w_ih_refs[l][...],
                                     preferred_element_type=f32)
                             + rec + b_bcast[l - 1])

                i_g, f_g, g_g, o_g = gate_activations(gates)
                c[l] = f_g * c[l] + i_g * g_g
                h[l] = o_g * jnp.tanh(c[l])

        # fc(lstm_out[:, -1, :]) — single lane-dense store.
        out = (jnp.dot(h[L - 1].astype(bf16), w_fc_ref[...],
                       preferred_element_type=f32)
               + b_fc_ref[...])
        out_ref[...] = out.astype(out_ref.dtype)

    return kernel


# ---------------------------------------------------------------------------
# Wrapper: pad / pack params, single pallas_call, slice real output.
# ---------------------------------------------------------------------------
def weather_predictor_lstm(x, params):
    """x: (B, T, F) float32 (batch_first, like PyTorch). Returns (B, output_size)."""
    B, T, F = x.shape
    L = len(params["w_ih"])
    H = params["w_hh"][0].shape[0]
    O = params["w_fc"].shape[1]

    B_pad = _round_up(max(B, 1), 8)        # sublane tile
    F_pad = _round_up(max(F, 1), 128)      # lane tile
    O_pad = _round_up(max(O, 1), 128)

    dense = (4 * H) <= 128
    if dense:
        stride = H            # gates packed densely into one 128-lane tile
        S = 128               # state lane width (live lanes [0, H))
        G_pad = 128
    else:
        stride = _round_up(H, 128)   # each gate on its own lane-tile block
        S = stride
        G_pad = 4 * stride

    def pack_gate_cols(w, rows_pad, dtype):
        """(rows, 4H) -> (rows_pad, G_pad); gate g at cols [g*stride, g*stride+H)."""
        rows = w.shape[0]
        out = jnp.zeros((rows_pad, G_pad), jnp.float32)
        for g in range(4):
            out = out.at[:rows, g * stride:g * stride + H].set(
                w[:, g * H:(g + 1) * H])
        return out.astype(dtype)

    w_ih_p, w_hh_p, b_p = [], [], []
    for l in range(L):
        in_pad = F_pad if l == 0 else S
        w_ih_p.append(pack_gate_cols(params["w_ih"][l], in_pad, jnp.bfloat16))
        w_hh_p.append(pack_gate_cols(params["w_hh"][l], S, jnp.bfloat16))
        b_p.append(pack_gate_cols(params["b"][l], 1, jnp.float32))

    w_fc_p = (jnp.zeros((S, O_pad), jnp.float32)
              .at[:H, :O].set(params["w_fc"]).astype(jnp.bfloat16))
    b_fc_p = jnp.zeros((1, O_pad), jnp.float32).at[:, :O].set(params["b_fc"])

    # Time-major, padded to native tiles, flattened to a lane-dense 2D slab so
    # the layer-0 projection for all timesteps is one well-shaped matmul.
    x_tm = jnp.transpose(x, (1, 0, 2)).astype(jnp.float32)           # (T, B, F)
    x_pad = (jnp.zeros((T, B_pad, F_pad), jnp.float32)
             .at[:, :B, :F].set(x_tm)
             .reshape(T * B_pad, F_pad)
             .astype(jnp.bfloat16))

    flat_inputs = [x_pad] + w_ih_p + w_hh_p + b_p + [w_fc_p, b_fc_p]
    in_specs = [pl.BlockSpec(a.shape, lambda i: (0, 0)) for a in flat_inputs]

    kernel = make_lstm_kernel(T, L, B_pad, H, S, G_pad, dense)

    out_pad = pl.pallas_call(
        kernel,
        out_shape=jax.ShapeDtypeStruct((B_pad, O_pad), jnp.float32),
        grid_spec=pltpu.PrefetchScalarGridSpec(
            num_scalar_prefetch=0,
            grid=(1,),                     # single step: whole sequence in-kernel
            in_specs=in_specs,
            out_specs=pl.BlockSpec((B_pad, O_pad), lambda i: (0, 0)),
        ),
        compiler_params=pltpu.CompilerParams(
            dimension_semantics=("arbitrary",)),
    )(*flat_inputs)

    return out_pad[:B, :O].astype(x.dtype)


# ---------------------------------------------------------------------------
# Deterministic parameter init (PyTorch-style uniform(-1/sqrt(H), 1/sqrt(H)))
# ---------------------------------------------------------------------------
def init_params(key, input_size, hidden_size, num_layers, output_size):
    H = hidden_size
    k = 1.0 / jnp.sqrt(jnp.float32(H))
    params = {"w_ih": [], "w_hh": [], "b": []}
    for l in range(num_layers):
        in_l = input_size if l == 0 else hidden_size
        key, k1, k2, k3, k4 = jax.random.split(key, 5)
        # stored transposed relative to PyTorch: (in_l, 4H) / (H, 4H)
        w_ih = jax.random.uniform(k1, (in_l, 4 * H), jnp.float32, -k, k)
        w_hh = jax.random.uniform(k2, (H, 4 * H), jnp.float32, -k, k)
        b_ih = jax.random.uniform(k3, (4 * H,), jnp.float32, -k, k)
        b_hh = jax.random.uniform(k4, (4 * H,), jnp.float32, -k, k)
        params["w_ih"].append(w_ih)
        params["w_hh"].append(w_hh)
        params["b"].append((b_ih + b_hh).reshape(1, 4 * H))
    key, k1, k2 = jax.random.split(key, 3)
    params["w_fc"] = jax.random.uniform(k1, (H, output_size), jnp.float32, -k, k)
    params["b_fc"] = jax.random.uniform(k2, (1, output_size), jnp.float32, -k, k)
    return params


# ---------------------------------------------------------------------------
# Pure-JAX reference (exact PyTorch LSTM semantics, f32) for correctness check
# ---------------------------------------------------------------------------
def reference_forward(x, params):
    B, T, F = x.shape
    L = len(params["w_ih"])
    H = params["w_hh"][0].shape[0]
    out = x
    for l in range(L):
        w_ih, w_hh, b = params["w_ih"][l], params["w_hh"][l], params["b"][l]
        h = jnp.zeros((B, H), jnp.float32)
        c = jnp.zeros((B, H), jnp.float32)
        ys = []
        for t in range(T):
            gates = out[:, t, :] @ w_ih + h @ w_hh + b
            i = jax.nn.sigmoid(gates[:, 0 * H:1 * H])
            f = jax.nn.sigmoid(gates[:, 1 * H:2 * H])
            g = jnp.tanh(gates[:, 2 * H:3 * H])
            o = jax.nn.sigmoid(gates[:, 3 * H:4 * H])
            c = f * c + i * g
            h = o * jnp.tanh(c)
            ys.append(h)
        out = jnp.stack(ys, axis=1)
    return out[:, -1, :] @ params["w_fc"] + params["b_fc"]


# ---------------------------------------------------------------------------
if __name__ == "__main__":
    # Small shapes implied by the module's forward:
    #   x: (batch, seq, input_size), hidden_size, num_layers, output_size
    B, T = 2, 8
    INPUT_SIZE, HIDDEN_SIZE, NUM_LAYERS, OUTPUT_SIZE = 4, 32, 2, 3

    key = jax.random.PRNGKey(0)
    key, xk = jax.random.split(key)
    x = jax.random.normal(xk, (B, T, INPUT_SIZE), jnp.float32)

    params = init_params(key, INPUT_SIZE, HIDDEN_SIZE, NUM_LAYERS, OUTPUT_SIZE)

    out = jax.block_until_ready(weather_predictor_lstm(x, params))
    ref = jax.block_until_ready(reference_forward(x, params))

    assert out.shape == (B, OUTPUT_SIZE), out.shape
    # Matmul operands are bf16 (TPU-native) with f32 accumulation and f32
    # gate/state math; 5e-3 covers bf16 operand rounding over T=8 steps.
    assert jnp.allclose(out, ref, atol=5e-3, rtol=5e-3), (out, ref)

    print("KERNEL_OK")
</pallas_src>

<mosaic_0001>
module attributes {stable_mosaic.version = 11 : i64} {
  func.func @kernel(%arg0: i32, %arg1: memref<64x128xbf16, #tpu.memory_space<vmem>>, %arg2: memref<128x128xbf16, #tpu.memory_space<vmem>>, %arg3: memref<128x128xbf16, #tpu.memory_space<vmem>>, %arg4: memref<128x128xbf16, #tpu.memory_space<vmem>>, %arg5: memref<128x128xbf16, #tpu.memory_space<vmem>>, %arg6: memref<1x128xf32, #tpu.memory_space<vmem>>, %arg7: memref<1x128xf32, #tpu.memory_space<vmem>>, %arg8: memref<128x128xbf16, #tpu.memory_space<vmem>>, %arg9: memref<1x128xf32, #tpu.memory_space<vmem>>, %arg10: memref<8x128xf32, #tpu.memory_space<vmem>>) attributes {dimension_semantics = [#tpu.dimension_semantics<arbitrary>], iteration_bounds = array<i64: 1>, scalar_prefetch = 0 : i64, scratch_operands = 0 : i64, tpu.core_type = #tpu.core_type<tc>, window_params = [{pipeline_mode = #tpu.pipeline_mode<synchronous>, transform_indices = @transform_0, window_bounds = array<i64: 64, 128>}, {pipeline_mode = #tpu.pipeline_mode<synchronous>, transform_indices = @transform_1, window_bounds = array<i64: 128, 128>}, {pipeline_mode = #tpu.pipeline_mode<synchronous>, transform_indices = @transform_2, window_bounds = array<i64: 128, 128>}, {pipeline_mode = #tpu.pipeline_mode<synchronous>, transform_indices = @transform_3, window_bounds = array<i64: 128, 128>}, {pipeline_mode = #tpu.pipeline_mode<synchronous>, transform_indices = @transform_4, window_bounds = array<i64: 128, 128>}, {pipeline_mode = #tpu.pipeline_mode<synchronous>, transform_indices = @transform_5, window_bounds = array<i64: 1, 128>}, {pipeline_mode = #tpu.pipeline_mode<synchronous>, transform_indices = @transform_6, window_bounds = array<i64: 1, 128>}, {pipeline_mode = #tpu.pipeline_mode<synchronous>, transform_indices = @transform_7, window_bounds = array<i64: 128, 128>}, {pipeline_mode = #tpu.pipeline_mode<synchronous>, transform_indices = @transform_8, window_bounds = array<i64: 1, 128>}, {pipeline_mode = #tpu.pipeline_mode<synchronous>, transform_indices = @transform_9, window_bounds = array<i64: 8, 128>}]} {
    %c0 = arith.constant 0 : index
    %c0_0 = arith.constant 0 : index
    %0 = vector.load %arg1[%c0, %c0_0] : memref<64x128xbf16, #tpu.memory_space<vmem>>, vector<64x128xbf16>
    %c0_1 = arith.constant 0 : index
    %c0_2 = arith.constant 0 : index
    %1 = vector.load %arg2[%c0_1, %c0_2] : memref<128x128xbf16, #tpu.memory_space<vmem>>, vector<128x128xbf16>
    %cst = arith.constant dense<0.000000e+00> : vector<64x128xf32>
    %2 = tpu.matmul %0, %1, %cst {dimension_numbers = #tpu.dot_dimension_numbers<[1], [0], [0], [1], [0, 0, 1, 1], [], []>} : vector<64x128xbf16>, vector<128x128xbf16>, vector<64x128xf32> -> vector<64x128xf32>
    %c0_3 = arith.constant 0 : index
    %c0_4 = arith.constant 0 : index
    %3 = vector.load %arg6[%c0_3, %c0_4] : memref<1x128xf32, #tpu.memory_space<vmem>>, vector<1x128xf32>
    %4 = vector.shape_cast %3 : vector<1x128xf32> to vector<1x128xf32>
    %5 = vector.broadcast %4 : vector<1x128xf32> to vector<64x128xf32>
    %6 = arith.addf %2, %5 : vector<64x128xf32>
    %c0_5 = arith.constant 0 : index
    %c0_6 = arith.constant 0 : index
    %7 = vector.load %arg7[%c0_5, %c0_6] : memref<1x128xf32, #tpu.memory_space<vmem>>, vector<1x128xf32>
    %8 = vector.shape_cast %7 : vector<1x128xf32> to vector<1x128xf32>
    %9 = vector.broadcast %8 : vector<1x128xf32> to vector<8x128xf32>
    %10 = tpu.iota {dimensions = array<i32: 1>} : vector<8x128xi32>
    %c32_i32 = arith.constant 32 : i32
    %11 = vector.broadcast %c32_i32 : i32 to vector<8x128xi32>
    %12 = arith.cmpi slt, %10, %11 : vector<8x128xi32>
    %cst_7 = arith.constant 0.000000e+00 : f32
    %13 = vector.broadcast %cst_7 : f32 to vector<8x128xf32>
    %cst_8 = arith.constant 0.000000e+00 : f32
    %14 = vector.broadcast %cst_8 : f32 to vector<8x128xf32>
    %cst_9 = arith.constant 0.000000e+00 : f32
    %15 = vector.broadcast %cst_9 : f32 to vector<8x128xf32>
    %cst_10 = arith.constant 0.000000e+00 : f32
    %16 = vector.broadcast %cst_10 : f32 to vector<8x128xf32>
    %17 = arith.truncf %13 : vector<8x128xf32> to vector<8x128xbf16>
    %c0_11 = arith.constant 0 : index
    %c0_12 = arith.constant 0 : index
    %18 = vector.load %arg4[%c0_11, %c0_12] : memref<128x128xbf16, #tpu.memory_space<vmem>>, vector<128x128xbf16>
    %cst_13 = arith.constant dense<0.000000e+00> : vector<8x128xf32>
    %19 = tpu.matmul %17, %18, %cst_13 {dimension_numbers = #tpu.dot_dimension_numbers<[1], [0], [0], [1], [0, 0, 1, 1], [], []>} : vector<8x128xbf16>, vector<128x128xbf16>, vector<8x128xf32> -> vector<8x128xf32>
    %20 = vector.extract_strided_slice %6 {offsets = [0, 0], sizes = [8, 128], strides = [1, 1]} : vector<64x128xf32> to vector<8x128xf32>
    %21 = arith.addf %20, %19 : vector<8x128xf32>
    %cst_14 = arith.constant 5.000000e-01 : f32
    %22 = vector.broadcast %cst_14 : f32 to vector<8x128xf32>
    %23 = arith.mulf %22, %21 : vector<8x128xf32>
    %24 = math.tanh %23 : vector<8x128xf32>
    %cst_15 = arith.constant 5.000000e-01 : f32
    %25 = vector.broadcast %cst_15 : f32 to vector<8x128xf32>
    %26 = arith.mulf %25, %24 : vector<8x128xf32>
    %cst_16 = arith.constant 5.000000e-01 : f32
    %27 = vector.broadcast %cst_16 : f32 to vector<8x128xf32>
    %28 = arith.addf %26, %27 : vector<8x128xf32>
    %29 = math.tanh %21 : vector<8x128xf32>
    %cst_17 = arith.constant 0.000000e+00 : f32
    %30 = vector.broadcast %cst_17 : f32 to vector<8x128xf32>
    %31 = arith.select %12, %28, %30 : vector<8x128xi1>, vector<8x128xf32>
    %c96_i32 = arith.constant 96 : i32
    %32 = tpu.dynamic_rotate %28 by %c96_i32 dim 1 : vector<8x128xf32>, i32 -> vector<8x128xf32>
    %c64_i32 = arith.constant 64 : i32
    %33 = tpu.dynamic_rotate %29 by %c64_i32 dim 1 : vector<8x128xf32>, i32 -> vector<8x128xf32>
    %c32_i32_18 = arith.constant 32 : i32
    %34 = tpu.dynamic_rotate %28 by %c32_i32_18 dim 1 : vector<8x128xf32>, i32 -> vector<8x128xf32>
    %35 = arith.mulf %32, %15 : vector<8x128xf32>
    %36 = arith.mulf %31, %33 : vector<8x128xf32>
    %37 = arith.addf %35, %36 : vector<8x128xf32>
    %38 = math.tanh %37 : vector<8x128xf32>
    %39 = arith.mulf %34, %38 : vector<8x128xf32>
    %40 = arith.truncf %14 : vector<8x128xf32> to vector<8x128xbf16>
    %c0_19 = arith.constant 0 : index
    %c0_20 = arith.constant 0 : index
    %41 = vector.load %arg5[%c0_19, %c0_20] : memref<128x128xbf16, #tpu.memory_space<vmem>>, vector<128x128xbf16>
    %cst_21 = arith.constant dense<0.000000e+00> : vector<8x128xf32>
    %42 = tpu.matmul %40, %41, %cst_21 {dimension_numbers = #tpu.dot_dimension_numbers<[1], [0], [0], [1], [0, 0, 1, 1], [], []>} : vector<8x128xbf16>, vector<128x128xbf16>, vector<8x128xf32> -> vector<8x128xf32>
    %43 = arith.truncf %39 : vector<8x128xf32> to vector<8x128xbf16>
    %c0_22 = arith.constant 0 : index
    %c0_23 = arith.constant 0 : index
    %44 = vector.load %arg3[%c0_22, %c0_23] : memref<128x128xbf16, #tpu.memory_space<vmem>>, vector<128x128xbf16>
    %cst_24 = arith.constant dense<0.000000e+00> : vector<8x128xf32>
    %45 = tpu.matmul %43, %44, %cst_24 {dimension_numbers = #tpu.dot_dimension_numbers<[1], [0], [0], [1], [0, 0, 1, 1], [], []>} : vector<8x128xbf16>, vector<128x128xbf16>, vector<8x128xf32> -> vector<8x128xf32>
    %46 = arith.addf %45, %42 : vector<8x128xf32>
    %47 = arith.addf %46, %9 : vector<8x128xf32>
    %cst_25 = arith.constant 5.000000e-01 : f32
    %48 = vector.broadcast %cst_25 : f32 to vector<8x128xf32>
    %49 = arith.mulf %48, %47 : vector<8x128xf32>
    %50 = math.tanh %49 : vector<8x128xf32>
    %cst_26 = arith.constant 5.000000e-01 : f32
    %51 = vector.broadcast %cst_26 : f32 to vector<8x128xf32>
    %52 = arith.mulf %51, %50 : vector<8x128xf32>
    %cst_27 = arith.constant 5.000000e-01 : f32
    %53 = vector.broadcast %cst_27 : f32 to vector<8x128xf32>
    %54 = arith.addf %52, %53 : vector<8x128xf32>
    %55 = math.tanh %47 : vector<8x128xf32>
    %cst_28 = arith.constant 0.000000e+00 : f32
    %56 = vector.broadcast %cst_28 : f32 to vector<8x128xf32>
    %57 = arith.select %12, %54, %56 : vector<8x128xi1>, vector<8x128xf32>
    %c96_i32_29 = arith.constant 96 : i32
    %58 = tpu.dynamic_rotate %54 by %c96_i32_29 dim 1 : vector<8x128xf32>, i32 -> vector<8x128xf32>
    %c64_i32_30 = arith.constant 64 : i32
    %59 = tpu.dynamic_rotate %55 by %c64_i32_30 dim 1 : vector<8x128xf32>, i32 -> vector<8x128xf32>
    %c32_i32_31 = arith.constant 32 : i32
    %60 = tpu.dynamic_rotate %54 by %c32_i32_31 dim 1 : vector<8x128xf32>, i32 -> vector<8x128xf32>
    %61 = arith.mulf %58, %16 : vector<8x128xf32>
    %62 = arith.mulf %57, %59 : vector<8x128xf32>
    %63 = arith.addf %61, %62 : vector<8x128xf32>
    %64 = math.tanh %63 : vector<8x128xf32>
    %65 = arith.mulf %60, %64 : vector<8x128xf32>
    %66 = arith.truncf %39 : vector<8x128xf32> to vector<8x128xbf16>
    %c0_32 = arith.constant 0 : index
    %c0_33 = arith.constant 0 : index
    %67 = vector.load %arg4[%c0_32, %c0_33] : memref<128x128xbf16, #tpu.memory_space<vmem>>, vector<128x128xbf16>
    %cst_34 = arith.constant dense<0.000000e+00> : vector<8x128xf32>
    %68 = tpu.matmul %66, %67, %cst_34 {dimension_numbers = #tpu.dot_dimension_numbers<[1], [0], [0], [1], [0, 0, 1, 1], [], []>} : vector<8x128xbf16>, vector<128x128xbf16>, vector<8x128xf32> -> vector<8x128xf32>
    %69 = vector.extract_strided_slice %6 {offsets = [8, 0], sizes = [8, 128], strides = [1, 1]} : vector<64x128xf32> to vector<8x128xf32>
    %70 = arith.addf %69, %68 : vector<8x128xf32>
    %cst_35 = arith.constant 5.000000e-01 : f32
    %71 = vector.broadcast %cst_35 : f32 to vector<8x128xf32>
    %72 = arith.mulf %71, %70 : vector<8x128xf32>
    %73 = math.tanh %72 : vector<8x128xf32>
    %cst_36 = arith.constant 5.000000e-01 : f32
    %74 = vector.broadcast %cst_36 : f32 to vector<8x128xf32>
    %75 = arith.mulf %74, %73 : vector<8x128xf32>
    %cst_37 = arith.constant 5.000000e-01 : f32
    %76 = vector.broadcast %cst_37 : f32 to vector<8x128xf32>
    %77 = arith.addf %75, %76 : vector<8x128xf32>
    %78 = math.tanh %70 : vector<8x128xf32>
    %cst_38 = arith.constant 0.000000e+00 : f32
    %79 = vector.broadcast %cst_38 : f32 to vector<8x128xf32>
    %80 = arith.select %12, %77, %79 : vector<8x128xi1>, vector<8x128xf32>
    %c96_i32_39 = arith.constant 96 : i32
    %81 = tpu.dynamic_rotate %77 by %c96_i32_39 dim 1 : vector<8x128xf32>, i32 -> vector<8x128xf32>
    %c64_i32_40 = arith.constant 64 : i32
    %82 = tpu.dynamic_rotate %78 by %c64_i32_40 dim 1 : vector<8x128xf32>, i32 -> vector<8x128xf32>
    %c32_i32_41 = arith.constant 32 : i32
    %83 = tpu.dynamic_rotate %77 by %c32_i32_41 dim 1 : vector<8x128xf32>, i32 -> vector<8x128xf32>
    %84 = arith.mulf %81, %37 : vector<8x128xf32>
    %85 = arith.mulf %80, %82 : vector<8x128xf32>
    %86 = arith.addf %84, %85 : vector<8x128xf32>
    %87 = math.tanh %86 : vector<8x128xf32>
    %88 = arith.mulf %83, %87 : vector<8x128xf32>
    %89 = arith.truncf %65 : vector<8x128xf32> to vector<8x128xbf16>
    %c0_42 = arith.constant 0 : index
    %c0_43 = arith.constant 0 : index
    %90 = vector.load %arg5[%c0_42, %c0_43] : memref<128x128xbf16, #tpu.memory_space<vmem>>, vector<128x128xbf16>
    %cst_44 = arith.constant dense<0.000000e+00> : vector<8x128xf32>
    %91 = tpu.matmul %89, %90, %cst_44 {dimension_numbers = #tpu.dot_dimension_numbers<[1], [0], [0], [1], [0, 0, 1, 1], [], []>} : vector<8x128xbf16>, vector<128x128xbf16>, vector<8x128xf32> -> vector<8x128xf32>
    %92 = arith.truncf %88 : vector<8x128xf32> to vector<8x128xbf16>
    %c0_45 = arith.constant 0 : index
    %c0_46 = arith.constant 0 : index
    %93 = vector.load %arg3[%c0_45, %c0_46] : memref<128x128xbf16, #tpu.memory_space<vmem>>, vector<128x128xbf16>
    %cst_47 = arith.constant dense<0.000000e+00> : vector<8x128xf32>
    %94 = tpu.matmul %92, %93, %cst_47 {dimension_numbers = #tpu.dot_dimension_numbers<[1], [0], [0], [1], [0, 0, 1, 1], [], []>} : vector<8x128xbf16>, vector<128x128xbf16>, vector<8x128xf32> -> vector<8x128xf32>
    %95 = arith.addf %94, %91 : vector<8x128xf32>
    %96 = arith.addf %95, %9 : vector<8x128xf32>
    %cst_48 = arith.constant 5.000000e-01 : f32
    %97 = vector.broadcast %cst_48 : f32 to vector<8x128xf32>
    %98 = arith.mulf %97, %96 : vector<8x128xf32>
    %99 = math.tanh %98 : vector<8x128xf32>
    %cst_49 = arith.constant 5.000000e-01 : f32
    %100 = vector.broadcast %cst_49 : f32 to vector<8x128xf32>
    %101 = arith.mulf %100, %99 : vector<8x128xf32>
    %cst_50 = arith.constant 5.000000e-01 : f32
    %102 = vector.broadcast %cst_50 : f32 to vector<8x128xf32>
    %103 = arith.addf %101, %102 : vector<8x128xf32>
    %104 = math.tanh %96 : vector<8x128xf32>
    %cst_51 = arith.constant 0.000000e+00 : f32
    %105 = vector.broadcast %cst_51 : f32 to vector<8x128xf32>
    %106 = arith.select %12, %103, %105 : vector<8x128xi1>, vector<8x128xf32>
    %c96_i32_52 = arith.constant 96 : i32
    %107 = tpu.dynamic_rotate %103 by %c96_i32_52 dim 1 : vector<8x128xf32>, i32 -> vector<8x128xf32>
    %c64_i32_53 = arith.constant 64 : i32
    %108 = tpu.dynamic_rotate %104 by %c64_i32_53 dim 1 : vector<8x128xf32>, i32 -> vector<8x128xf32>
    %c32_i32_54 = arith.constant 32 : i32
    %109 = tpu.dynamic_rotate %103 by %c32_i32_54 dim 1 : vector<8x128xf32>, i32 -> vector<8x128xf32>
    %110 = arith.mulf %107, %63 : vector<8x128xf32>
    %111 = arith.mulf %106, %108 : vector<8x128xf32>
    %112 = arith.addf %110, %111 : vector<8x128xf32>
    %113 = math.tanh %112 : vector<8x128xf32>
    %114 = arith.mulf %109, %113 : vector<8x128xf32>
    %115 = arith.truncf %88 : vector<8x128xf32> to vector<8x128xbf16>
    %c0_55 = arith.constant 0 : index
    %c0_56 = arith.constant 0 : index
    %116 = vector.load %arg4[%c0_55, %c0_56] : memref<128x128xbf16, #tpu.memory_space<vmem>>, vector<128x128xbf16>
    %cst_57 = arith.constant dense<0.000000e+00> : vector<8x128xf32>
    %117 = tpu.matmul %115, %116, %cst_57 {dimension_numbers = #tpu.dot_dimension_numbers<[1], [0], [0], [1], [0, 0, 1, 1], [], []>} : vector<8x128xbf16>, vector<128x128xbf16>, vector<8x128xf32> -> vector<8x128xf32>
    %118 = vector.extract_strided_slice %6 {offsets = [16, 0], sizes = [8, 128], strides = [1, 1]} : vector<64x128xf32> to vector<8x128xf32>
    %119 = arith.addf %118, %117 : vector<8x128xf32>
    %cst_58 = arith.constant 5.000000e-01 : f32
    %120 = vector.broadcast %cst_58 : f32 to vector<8x128xf32>
    %121 = arith.mulf %120, %119 : vector<8x128xf32>
    %122 = math.tanh %121 : vector<8x128xf32>
    %cst_59 = arith.constant 5.000000e-01 : f32
    %123 = vector.broadcast %cst_59 : f32 to vector<8x128xf32>
    %124 = arith.mulf %123, %122 : vector<8x128xf32>
    %cst_60 = arith.constant 5.000000e-01 : f32
    %125 = vector.broadcast %cst_60 : f32 to vector<8x128xf32>
    %126 = arith.addf %124, %125 : vector<8x128xf32>
    %127 = math.tanh %119 : vector<8x128xf32>
    %cst_61 = arith.constant 0.000000e+00 : f32
    %128 = vector.broadcast %cst_61 : f32 to vector<8x128xf32>
    %129 = arith.select %12, %126, %128 : vector<8x128xi1>, vector<8x128xf32>
    %c96_i32_62 = arith.constant 96 : i32
    %130 = tpu.dynamic_rotate %126 by %c96_i32_62 dim 1 : vector<8x128xf32>, i32 -> vector<8x128xf32>
    %c64_i32_63 = arith.constant 64 : i32
    %131 = tpu.dynamic_rotate %127 by %c64_i32_63 dim 1 : vector<8x128xf32>, i32 -> vector<8x128xf32>
    %c32_i32_64 = arith.constant 32 : i32
    %132 = tpu.dynamic_rotate %126 by %c32_i32_64 dim 1 : vector<8x128xf32>, i32 -> vector<8x128xf32>
    %133 = arith.mulf %130, %86 : vector<8x128xf32>
    %134 = arith.mulf %129, %131 : vector<8x128xf32>
    %135 = arith.addf %133, %134 : vector<8x128xf32>
    %136 = math.tanh %135 : vector<8x128xf32>
    %137 = arith.mulf %132, %136 : vector<8x128xf32>
    %138 = arith.truncf %114 : vector<8x128xf32> to vector<8x128xbf16>
    %c0_65 = arith.constant 0 : index
    %c0_66 = arith.constant 0 : index
    %139 = vector.load %arg5[%c0_65, %c0_66] : memref<128x128xbf16, #tpu.memory_space<vmem>>, vector<128x128xbf16>
    %cst_67 = arith.constant dense<0.000000e+00> : vector<8x128xf32>
    %140 = tpu.matmul %138, %139, %cst_67 {dimension_numbers = #tpu.dot_dimension_numbers<[1], [0], [0], [1], [0, 0, 1, 1], [], []>} : vector<8x128xbf16>, vector<128x128xbf16>, vector<8x128xf32> -> vector<8x128xf32>
    %141 = arith.truncf %137 : vector<8x128xf32> to vector<8x128xbf16>
    %c0_68 = arith.constant 0 : index
    %c0_69 = arith.constant 0 : index
    %142 = vector.load %arg3[%c0_68, %c0_69] : memref<128x128xbf16, #tpu.memory_space<vmem>>, vector<128x128xbf16>
    %cst_70 = arith.constant dense<0.000000e+00> : vector<8x128xf32>
    %143 = tpu.matmul %141, %142, %cst_70 {dimension_numbers = #tpu.dot_dimension_numbers<[1], [0], [0], [1], [0, 0, 1, 1], [], []>} : vector<8x128xbf16>, vector<128x128xbf16>, vector<8x128xf32> -> vector<8x128xf32>
    %144 = arith.addf %143, %140 : vector<8x128xf32>
    %145 = arith.addf %144, %9 : vector<8x128xf32>
    %cst_71 = arith.constant 5.000000e-01 : f32
    %146 = vector.broadcast %cst_71 : f32 to vector<8x128xf32>
    %147 = arith.mulf %146, %145 : vector<8x128xf32>
    %148 = math.tanh %147 : vector<8x128xf32>
    %cst_72 = arith.constant 5.000000e-01 : f32
    %149 = vector.broadcast %cst_72 : f32 to vector<8x128xf32>
    %150 = arith.mulf %149, %148 : vector<8x128xf32>
    %cst_73 = arith.constant 5.000000e-01 : f32
    %151 = vector.broadcast %cst_73 : f32 to vector<8x128xf32>
    %152 = arith.addf %150, %151 : vector<8x128xf32>
    %153 = math.tanh %145 : vector<8x128xf32>
    %cst_74 = arith.constant 0.000000e+00 : f32
    %154 = vector.broadcast %cst_74 : f32 to vector<8x128xf32>
    %155 = arith.select %12, %152, %154 : vector<8x128xi1>, vector<8x128xf32>
    %c96_i32_75 = arith.constant 96 : i32
    %156 = tpu.dynamic_rotate %152 by %c96_i32_75 dim 1 : vector<8x128xf32>, i32 -> vector<8x128xf32>
    %c64_i32_76 = arith.constant 64 : i32
    %157 = tpu.dynamic_rotate %153 by %c64_i32_76 dim 1 : vector<8x128xf32>, i32 -> vector<8x128xf32>
    %c32_i32_77 = arith.constant 32 : i32
    %158 = tpu.dynamic_rotate %152 by %c32_i32_77 dim 1 : vector<8x128xf32>, i32 -> vector<8x128xf32>
    %159 = arith.mulf %156, %112 : vector<8x128xf32>
    %160 = arith.mulf %155, %157 : vector<8x128xf32>
    %161 = arith.addf %159, %160 : vector<8x128xf32>
    %162 = math.tanh %161 : vector<8x128xf32>
    %163 = arith.mulf %158, %162 : vector<8x128xf32>
    %164 = arith.truncf %137 : vector<8x128xf32> to vector<8x128xbf16>
    %c0_78 = arith.constant 0 : index
    %c0_79 = arith.constant 0 : index
    %165 = vector.load %arg4[%c0_78, %c0_79] : memref<128x128xbf16, #tpu.memory_space<vmem>>, vector<128x128xbf16>
    %cst_80 = arith.constant dense<0.000000e+00> : vector<8x128xf32>
    %166 = tpu.matmul %164, %165, %cst_80 {dimension_numbers = #tpu.dot_dimension_numbers<[1], [0], [0], [1], [0, 0, 1, 1], [], []>} : vector<8x128xbf16>, vector<128x128xbf16>, vector<8x128xf32> -> vector<8x128xf32>
    %167 = vector.extract_strided_slice %6 {offsets = [24, 0], sizes = [8, 128], strides = [1, 1]} : vector<64x128xf32> to vector<8x128xf32>
    %168 = arith.addf %167, %166 : vector<8x128xf32>
    %cst_81 = arith.constant 5.000000e-01 : f32
    %169 = vector.broadcast %cst_81 : f32 to vector<8x128xf32>
    %170 = arith.mulf %169, %168 : vector<8x128xf32>
    %171 = math.tanh %170 : vector<8x128xf32>
    %cst_82 = arith.constant 5.000000e-01 : f32
    %172 = vector.broadcast %cst_82 : f32 to vector<8x128xf32>
    %173 = arith.mulf %172, %171 : vector<8x128xf32>
    %cst_83 = arith.constant 5.000000e-01 : f32
    %174 = vector.broadcast %cst_83 : f32 to vector<8x128xf32>
    %175 = arith.addf %173, %174 : vector<8x128xf32>
    %176 = math.tanh %168 : vector<8x128xf32>
    %cst_84 = arith.constant 0.000000e+00 : f32
    %177 = vector.broadcast %cst_84 : f32 to vector<8x128xf32>
    %178 = arith.select %12, %175, %177 : vector<8x128xi1>, vector<8x128xf32>
    %c96_i32_85 = arith.constant 96 : i32
    %179 = tpu.dynamic_rotate %175 by %c96_i32_85 dim 1 : vector<8x128xf32>, i32 -> vector<8x128xf32>
    %c64_i32_86 = arith.constant 64 : i32
    %180 = tpu.dynamic_rotate %176 by %c64_i32_86 dim 1 : vector<8x128xf32>, i32 -> vector<8x128xf32>
    %c32_i32_87 = arith.constant 32 : i32
    %181 = tpu.dynamic_rotate %175 by %c32_i32_87 dim 1 : vector<8x128xf32>, i32 -> vector<8x128xf32>
    %182 = arith.mulf %179, %135 : vector<8x128xf32>
    %183 = arith.mulf %178, %180 : vector<8x128xf32>
    %184 = arith.addf %182, %183 : vector<8x128xf32>
    %185 = math.tanh %184 : vector<8x128xf32>
    %186 = arith.mulf %181, %185 : vector<8x128xf32>
    %187 = arith.truncf %163 : vector<8x128xf32> to vector<8x128xbf16>
    %c0_88 = arith.constant 0 : index
    %c0_89 = arith.constant 0 : index
    %188 = vector.load %arg5[%c0_88, %c0_89] : memref<128x128xbf16, #tpu.memory_space<vmem>>, vector<128x128xbf16>
    %cst_90 = arith.constant dense<0.000000e+00> : vector<8x128xf32>
    %189 = tpu.matmul %187, %188, %cst_90 {dimension_numbers = #tpu.dot_dimension_numbers<[1], [0], [0], [1], [0, 0, 1, 1], [], []>} : vector<8x128xbf16>, vector<128x128xbf16>, vector<8x128xf32> -> vector<8x128xf32>
    %190 = arith.truncf %186 : vector<8x128xf32> to vector<8x128xbf16>
    %c0_91 = arith.constant 0 : index
    %c0_92 = arith.constant 0 : index
    %191 = vector.load %arg3[%c0_91, %c0_92] : memref<128x128xbf16, #tpu.memory_space<vmem>>, vector<128x128xbf16>
    %cst_93 = arith.constant dense<0.000000e+00> : vector<8x128xf32>
    %192 = tpu.matmul %190, %191, %cst_93 {dimension_numbers = #tpu.dot_dimension_numbers<[1], [0], [0], [1], [0, 0, 1, 1], [], []>} : vector<8x128xbf16>, vector<128x128xbf16>, vector<8x128xf32> -> vector<8x128xf32>
    %193 = arith.addf %192, %189 : vector<8x128xf32>
    %194 = arith.addf %193, %9 : vector<8x128xf32>
    %cst_94 = arith.constant 5.000000e-01 : f32
    %195 = vector.broadcast %cst_94 : f32 to vector<8x128xf32>
    %196 = arith.mulf %195, %194 : vector<8x128xf32>
    %197 = math.tanh %196 : vector<8x128xf32>
    %cst_95 = arith.constant 5.000000e-01 : f32
    %198 = vector.broadcast %cst_95 : f32 to vector<8x128xf32>
    %199 = arith.mulf %198, %197 : vector<8x128xf32>
    %cst_96 = arith.constant 5.000000e-01 : f32
    %200 = vector.broadcast %cst_96 : f32 to vector<8x128xf32>
    %201 = arith.addf %199, %200 : vector<8x128xf32>
    %202 = math.tanh %194 : vector<8x128xf32>
    %cst_97 = arith.constant 0.000000e+00 : f32
    %203 = vector.broadcast %cst_97 : f32 to vector<8x128xf32>
    %204 = arith.select %12, %201, %203 : vector<8x128xi1>, vector<8x128xf32>
    %c96_i32_98 = arith.constant 96 : i32
    %205 = tpu.dynamic_rotate %201 by %c96_i32_98 dim 1 : vector<8x128xf32>, i32 -> vector<8x128xf32>
    %c64_i32_99 = arith.constant 64 : i32
    %206 = tpu.dynamic_rotate %202 by %c64_i32_99 dim 1 : vector<8x128xf32>, i32 -> vector<8x128xf32>
    %c32_i32_100 = arith.constant 32 : i32
    %207 = tpu.dynamic_rotate %201 by %c32_i32_100 dim 1 : vector<8x128xf32>, i32 -> vector<8x128xf32>
    %208 = arith.mulf %205, %161 : vector<8x128xf32>
    %209 = arith.mulf %204, %206 : vector<8x128xf32>
    %210 = arith.addf %208, %209 : vector<8x128xf32>
    %211 = math.tanh %210 : vector<8x128xf32>
    %212 = arith.mulf %207, %211 : vector<8x128xf32>
    %213 = arith.truncf %186 : vector<8x128xf32> to vector<8x128xbf16>
    %c0_101 = arith.constant 0 : index
    %c0_102 = arith.constant 0 : index
    %214 = vector.load %arg4[%c0_101, %c0_102] : memref<128x128xbf16, #tpu.memory_space<vmem>>, vector<128x128xbf16>
    %cst_103 = arith.constant dense<0.000000e+00> : vector<8x128xf32>
    %215 = tpu.matmul %213, %214, %cst_103 {dimension_numbers = #tpu.dot_dimension_numbers<[1], [0], [0], [1], [0, 0, 1, 1], [], []>} : vector<8x128xbf16>, vector<128x128xbf16>, vector<8x128xf32> -> vector<8x128xf32>
    %216 = vector.extract_strided_slice %6 {offsets = [32, 0], sizes = [8, 128], strides = [1, 1]} : vector<64x128xf32> to vector<8x128xf32>
    %217 = arith.addf %216, %215 : vector<8x128xf32>
    %cst_104 = arith.constant 5.000000e-01 : f32
    %218 = vector.broadcast %cst_104 : f32 to vector<8x128xf32>
    %219 = arith.mulf %218, %217 : vector<8x128xf32>
    %220 = math.tanh %219 : vector<8x128xf32>
    %cst_105 = arith.constant 5.000000e-01 : f32
    %221 = vector.broadcast %cst_105 : f32 to vector<8x128xf32>
    %222 = arith.mulf %221, %220 : vector<8x128xf32>
    %cst_106 = arith.constant 5.000000e-01 : f32
    %223 = vector.broadcast %cst_106 : f32 to vector<8x128xf32>
    %224 = arith.addf %222, %223 : vector<8x128xf32>
    %225 = math.tanh %217 : vector<8x128xf32>
    %cst_107 = arith.constant 0.000000e+00 : f32
    %226 = vector.broadcast %cst_107 : f32 to vector<8x128xf32>
    %227 = arith.select %12, %224, %226 : vector<8x128xi1>, vector<8x128xf32>
    %c96_i32_108 = arith.constant 96 : i32
    %228 = tpu.dynamic_rotate %224 by %c96_i32_108 dim 1 : vector<8x128xf32>, i32 -> vector<8x128xf32>
    %c64_i32_109 = arith.constant 64 : i32
    %229 = tpu.dynamic_rotate %225 by %c64_i32_109 dim 1 : vector<8x128xf32>, i32 -> vector<8x128xf32>
    %c32_i32_110 = arith.constant 32 : i32
    %230 = tpu.dynamic_rotate %224 by %c32_i32_110 dim 1 : vector<8x128xf32>, i32 -> vector<8x128xf32>
    %231 = arith.mulf %228, %184 : vector<8x128xf32>
    %232 = arith.mulf %227, %229 : vector<8x128xf32>
    %233 = arith.addf %231, %232 : vector<8x128xf32>
    %234 = math.tanh %233 : vector<8x128xf32>
    %235 = arith.mulf %230, %234 : vector<8x128xf32>
    %236 = arith.truncf %212 : vector<8x128xf32> to vector<8x128xbf16>
    %c0_111 = arith.constant 0 : index
    %c0_112 = arith.constant 0 : index
    %237 = vector.load %arg5[%c0_111, %c0_112] : memref<128x128xbf16, #tpu.memory_space<vmem>>, vector<128x128xbf16>
    %cst_113 = arith.constant dense<0.000000e+00> : vector<8x128xf32>
    %238 = tpu.matmul %236, %237, %cst_113 {dimension_numbers = #tpu.dot_dimension_numbers<[1], [0], [0], [1], [0, 0, 1, 1], [], []>} : vector<8x128xbf16>, vector<128x128xbf16>, vector<8x128xf32> -> vector<8x128xf32>
    %239 = arith.truncf %235 : vector<8x128xf32> to vector<8x128xbf16>
    %c0_114 = arith.constant 0 : index
    %c0_115 = arith.constant 0 : index
    %240 = vector.load %arg3[%c0_114, %c0_115] : memref<128x128xbf16, #tpu.memory_space<vmem>>, vector<128x128xbf16>
    %cst_116 = arith.constant dense<0.000000e+00> : vector<8x128xf32>
    %241 = tpu.matmul %239, %240, %cst_116 {dimension_numbers = #tpu.dot_dimension_numbers<[1], [0], [0], [1], [0, 0, 1, 1], [], []>} : vector<8x128xbf16>, vector<128x128xbf16>, vector<8x128xf32> -> vector<8x128xf32>
    %242 = arith.addf %241, %238 : vector<8x128xf32>
    %243 = arith.addf %242, %9 : vector<8x128xf32>
    %cst_117 = arith.constant 5.000000e-01 : f32
    %244 = vector.broadcast %cst_117 : f32 to vector<8x128xf32>
    %245 = arith.mulf %244, %243 : vector<8x128xf32>
    %246 = math.tanh %245 : vector<8x128xf32>
    %cst_118 = arith.constant 5.000000e-01 : f32
    %247 = vector.broadcast %cst_118 : f32 to vector<8x128xf32>
    %248 = arith.mulf %247, %246 : vector<8x128xf32>
    %cst_119 = arith.constant 5.000000e-01 : f32
    %249 = vector.broadcast %cst_119 : f32 to vector<8x128xf32>
    %250 = arith.addf %248, %249 : vector<8x128xf32>
    %251 = math.tanh %243 : vector<8x128xf32>
    %cst_120 = arith.constant 0.000000e+00 : f32
    %252 = vector.broadcast %cst_120 : f32 to vector<8x128xf32>
    %253 = arith.select %12, %250, %252 : vector<8x128xi1>, vector<8x128xf32>
    %c96_i32_121 = arith.constant 96 : i32
    %254 = tpu.dynamic_rotate %250 by %c96_i32_121 dim 1 : vector<8x128xf32>, i32 -> vector<8x128xf32>
    %c64_i32_122 = arith.constant 64 : i32
    %255 = tpu.dynamic_rotate %251 by %c64_i32_122 dim 1 : vector<8x128xf32>, i32 -> vector<8x128xf32>
    %c32_i32_123 = arith.constant 32 : i32
    %256 = tpu.dynamic_rotate %250 by %c32_i32_123 dim 1 : vector<8x128xf32>, i32 -> vector<8x128xf32>
    %257 = arith.mulf %254, %210 : vector<8x128xf32>
    %258 = arith.mulf %253, %255 : vector<8x128xf32>
    %259 = arith.addf %257, %258 : vector<8x128xf32>
    %260 = math.tanh %259 : vector<8x128xf32>
    %261 = arith.mulf %256, %260 : vector<8x128xf32>
    %262 = arith.truncf %235 : vector<8x128xf32> to vector<8x128xbf16>
    %c0_124 = arith.constant 0 : index
    %c0_125 = arith.constant 0 : index
    %263 = vector.load %arg4[%c0_124, %c0_125] : memref<128x128xbf16, #tpu.memory_space<vmem>>, vector<128x128xbf16>
    %cst_126 = arith.constant dense<0.000000e+00> : vector<8x128xf32>
    %264 = tpu.matmul %262, %263, %cst_126 {dimension_numbers = #tpu.dot_dimension_numbers<[1], [0], [0], [1], [0, 0, 1, 1], [], []>} : vector<8x128xbf16>, vector<128x128xbf16>, vector<8x128xf32> -> vector<8x128xf32>
    %265 = vector.extract_strided_slice %6 {offsets = [40, 0], sizes = [8, 128], strides = [1, 1]} : vector<64x128xf32> to vector<8x128xf32>
    %266 = arith.addf %265, %264 : vector<8x128xf32>
    %cst_127 = arith.constant 5.000000e-01 : f32
    %267 = vector.broadcast %cst_127 : f32 to vector<8x128xf32>
    %268 = arith.mulf %267, %266 : vector<8x128xf32>
    %269 = math.tanh %268 : vector<8x128xf32>
    %cst_128 = arith.constant 5.000000e-01 : f32
    %270 = vector.broadcast %cst_128 : f32 to vector<8x128xf32>
    %271 = arith.mulf %270, %269 : vector<8x128xf32>
    %cst_129 = arith.constant 5.000000e-01 : f32
    %272 = vector.broadcast %cst_129 : f32 to vector<8x128xf32>
    %273 = arith.addf %271, %272 : vector<8x128xf32>
    %274 = math.tanh %266 : vector<8x128xf32>
    %cst_130 = arith.constant 0.000000e+00 : f32
    %275 = vector.broadcast %cst_130 : f32 to vector<8x128xf32>
    %276 = arith.select %12, %273, %275 : vector<8x128xi1>, vector<8x128xf32>
    %c96_i32_131 = arith.constant 96 : i32
    %277 = tpu.dynamic_rotate %273 by %c96_i32_131 dim 1 : vector<8x128xf32>, i32 -> vector<8x128xf32>
    %c64_i32_132 = arith.constant 64 : i32
    %278 = tpu.dynamic_rotate %274 by %c64_i32_132 dim 1 : vector<8x128xf32>, i32 -> vector<8x128xf32>
    %c32_i32_133 = arith.constant 32 : i32
    %279 = tpu.dynamic_rotate %273 by %c32_i32_133 dim 1 : vector<8x128xf32>, i32 -> vector<8x128xf32>
    %280 = arith.mulf %277, %233 : vector<8x128xf32>
    %281 = arith.mulf %276, %278 : vector<8x128xf32>
    %282 = arith.addf %280, %281 : vector<8x128xf32>
    %283 = math.tanh %282 : vector<8x128xf32>
    %284 = arith.mulf %279, %283 : vector<8x128xf32>
    %285 = arith.truncf %261 : vector<8x128xf32> to vector<8x128xbf16>
    %c0_134 = arith.constant 0 : index
    %c0_135 = arith.constant 0 : index
    %286 = vector.load %arg5[%c0_134, %c0_135] : memref<128x128xbf16, #tpu.memory_space<vmem>>, vector<128x128xbf16>
    %cst_136 = arith.constant dense<0.000000e+00> : vector<8x128xf32>
    %287 = tpu.matmul %285, %286, %cst_136 {dimension_numbers = #tpu.dot_dimension_numbers<[1], [0], [0], [1], [0, 0, 1, 1], [], []>} : vector<8x128xbf16>, vector<128x128xbf16>, vector<8x128xf32> -> vector<8x128xf32>
    %288 = arith.truncf %284 : vector<8x128xf32> to vector<8x128xbf16>
    %c0_137 = arith.constant 0 : index
    %c0_138 = arith.constant 0 : index
    %289 = vector.load %arg3[%c0_137, %c0_138] : memref<128x128xbf16, #tpu.memory_space<vmem>>, vector<128x128xbf16>
    %cst_139 = arith.constant dense<0.000000e+00> : vector<8x128xf32>
    %290 = tpu.matmul %288, %289, %cst_139 {dimension_numbers = #tpu.dot_dimension_numbers<[1], [0], [0], [1], [0, 0, 1, 1], [], []>} : vector<8x128xbf16>, vector<128x128xbf16>, vector<8x128xf32> -> vector<8x128xf32>
    %291 = arith.addf %290, %287 : vector<8x128xf32>
    %292 = arith.addf %291, %9 : vector<8x128xf32>
    %cst_140 = arith.constant 5.000000e-01 : f32
    %293 = vector.broadcast %cst_140 : f32 to vector<8x128xf32>
    %294 = arith.mulf %293, %292 : vector<8x128xf32>
    %295 = math.tanh %294 : vector<8x128xf32>
    %cst_141 = arith.constant 5.000000e-01 : f32
    %296 = vector.broadcast %cst_141 : f32 to vector<8x128xf32>
    %297 = arith.mulf %296, %295 : vector<8x128xf32>
    %cst_142 = arith.constant 5.000000e-01 : f32
    %298 = vector.broadcast %cst_142 : f32 to vector<8x128xf32>
    %299 = arith.addf %297, %298 : vector<8x128xf32>
    %300 = math.tanh %292 : vector<8x128xf32>
    %cst_143 = arith.constant 0.000000e+00 : f32
    %301 = vector.broadcast %cst_143 : f32 to vector<8x128xf32>
    %302 = arith.select %12, %299, %301 : vector<8x128xi1>, vector<8x128xf32>
    %c96_i32_144 = arith.constant 96 : i32
    %303 = tpu.dynamic_rotate %299 by %c96_i32_144 dim 1 : vector<8x128xf32>, i32 -> vector<8x128xf32>
    %c64_i32_145 = arith.constant 64 : i32
    %304 = tpu.dynamic_rotate %300 by %c64_i32_145 dim 1 : vector<8x128xf32>, i32 -> vector<8x128xf32>
    %c32_i32_146 = arith.constant 32 : i32
    %305 = tpu.dynamic_rotate %299 by %c32_i32_146 dim 1 : vector<8x128xf32>, i32 -> vector<8x128xf32>
    %306 = arith.mulf %303, %259 : vector<8x128xf32>
    %307 = arith.mulf %302, %304 : vector<8x128xf32>
    %308 = arith.addf %306, %307 : vector<8x128xf32>
    %309 = math.tanh %308 : vector<8x128xf32>
    %310 = arith.mulf %305, %309 : vector<8x128xf32>
    %311 = arith.truncf %284 : vector<8x128xf32> to vector<8x128xbf16>
    %c0_147 = arith.constant 0 : index
    %c0_148 = arith.constant 0 : index
    %312 = vector.load %arg4[%c0_147, %c0_148] : memref<128x128xbf16, #tpu.memory_space<vmem>>, vector<128x128xbf16>
    %cst_149 = arith.constant dense<0.000000e+00> : vector<8x128xf32>
    %313 = tpu.matmul %311, %312, %cst_149 {dimension_numbers = #tpu.dot_dimension_numbers<[1], [0], [0], [1], [0, 0, 1, 1], [], []>} : vector<8x128xbf16>, vector<128x128xbf16>, vector<8x128xf32> -> vector<8x128xf32>
    %314 = vector.extract_strided_slice %6 {offsets = [48, 0], sizes = [8, 128], strides = [1, 1]} : vector<64x128xf32> to vector<8x128xf32>
    %315 = arith.addf %314, %313 : vector<8x128xf32>
    %cst_150 = arith.constant 5.000000e-01 : f32
    %316 = vector.broadcast %cst_150 : f32 to vector<8x128xf32>
    %317 = arith.mulf %316, %315 : vector<8x128xf32>
    %318 = math.tanh %317 : vector<8x128xf32>
    %cst_151 = arith.constant 5.000000e-01 : f32
    %319 = vector.broadcast %cst_151 : f32 to vector<8x128xf32>
    %320 = arith.mulf %319, %318 : vector<8x128xf32>
    %cst_152 = arith.constant 5.000000e-01 : f32
    %321 = vector.broadcast %cst_152 : f32 to vector<8x128xf32>
    %322 = arith.addf %320, %321 : vector<8x128xf32>
    %323 = math.tanh %315 : vector<8x128xf32>
    %cst_153 = arith.constant 0.000000e+00 : f32
    %324 = vector.broadcast %cst_153 : f32 to vector<8x128xf32>
    %325 = arith.select %12, %322, %324 : vector<8x128xi1>, vector<8x128xf32>
    %c96_i32_154 = arith.constant 96 : i32
    %326 = tpu.dynamic_rotate %322 by %c96_i32_154 dim 1 : vector<8x128xf32>, i32 -> vector<8x128xf32>
    %c64_i32_155 = arith.constant 64 : i32
    %327 = tpu.dynamic_rotate %323 by %c64_i32_155 dim 1 : vector<8x128xf32>, i32 -> vector<8x128xf32>
    %c32_i32_156 = arith.constant 32 : i32
    %328 = tpu.dynamic_rotate %322 by %c32_i32_156 dim 1 : vector<8x128xf32>, i32 -> vector<8x128xf32>
    %329 = arith.mulf %326, %282 : vector<8x128xf32>
    %330 = arith.mulf %325, %327 : vector<8x128xf32>
    %331 = arith.addf %329, %330 : vector<8x128xf32>
    %332 = math.tanh %331 : vector<8x128xf32>
    %333 = arith.mulf %328, %332 : vector<8x128xf32>
    %334 = arith.truncf %310 : vector<8x128xf32> to vector<8x128xbf16>
    %c0_157 = arith.constant 0 : index
    %c0_158 = arith.constant 0 : index
    %335 = vector.load %arg5[%c0_157, %c0_158] : memref<128x128xbf16, #tpu.memory_space<vmem>>, vector<128x128xbf16>
    %cst_159 = arith.constant dense<0.000000e+00> : vector<8x128xf32>
    %336 = tpu.matmul %334, %335, %cst_159 {dimension_numbers = #tpu.dot_dimension_numbers<[1], [0], [0], [1], [0, 0, 1, 1], [], []>} : vector<8x128xbf16>, vector<128x128xbf16>, vector<8x128xf32> -> vector<8x128xf32>
    %337 = arith.truncf %333 : vector<8x128xf32> to vector<8x128xbf16>
    %c0_160 = arith.constant 0 : index
    %c0_161 = arith.constant 0 : index
    %338 = vector.load %arg3[%c0_160, %c0_161] : memref<128x128xbf16, #tpu.memory_space<vmem>>, vector<128x128xbf16>
    %cst_162 = arith.constant dense<0.000000e+00> : vector<8x128xf32>
    %339 = tpu.matmul %337, %338, %cst_162 {dimension_numbers = #tpu.dot_dimension_numbers<[1], [0], [0], [1], [0, 0, 1, 1], [], []>} : vector<8x128xbf16>, vector<128x128xbf16>, vector<8x128xf32> -> vector<8x128xf32>
    %340 = arith.addf %339, %336 : vector<8x128xf32>
    %341 = arith.addf %340, %9 : vector<8x128xf32>
    %cst_163 = arith.constant 5.000000e-01 : f32
    %342 = vector.broadcast %cst_163 : f32 to vector<8x128xf32>
    %343 = arith.mulf %342, %341 : vector<8x128xf32>
    %344 = math.tanh %343 : vector<8x128xf32>
    %cst_164 = arith.constant 5.000000e-01 : f32
    %345 = vector.broadcast %cst_164 : f32 to vector<8x128xf32>
    %346 = arith.mulf %345, %344 : vector<8x128xf32>
    %cst_165 = arith.constant 5.000000e-01 : f32
    %347 = vector.broadcast %cst_165 : f32 to vector<8x128xf32>
    %348 = arith.addf %346, %347 : vector<8x128xf32>
    %349 = math.tanh %341 : vector<8x128xf32>
    %cst_166 = arith.constant 0.000000e+00 : f32
    %350 = vector.broadcast %cst_166 : f32 to vector<8x128xf32>
    %351 = arith.select %12, %348, %350 : vector<8x128xi1>, vector<8x128xf32>
    %c96_i32_167 = arith.constant 96 : i32
    %352 = tpu.dynamic_rotate %348 by %c96_i32_167 dim 1 : vector<8x128xf32>, i32 -> vector<8x128xf32>
    %c64_i32_168 = arith.constant 64 : i32
    %353 = tpu.dynamic_rotate %349 by %c64_i32_168 dim 1 : vector<8x128xf32>, i32 -> vector<8x128xf32>
    %c32_i32_169 = arith.constant 32 : i32
    %354 = tpu.dynamic_rotate %348 by %c32_i32_169 dim 1 : vector<8x128xf32>, i32 -> vector<8x128xf32>
    %355 = arith.mulf %352, %308 : vector<8x128xf32>
    %356 = arith.mulf %351, %353 : vector<8x128xf32>
    %357 = arith.addf %355, %356 : vector<8x128xf32>
    %358 = math.tanh %357 : vector<8x128xf32>
    %359 = arith.mulf %354, %358 : vector<8x128xf32>
    %360 = arith.truncf %333 : vector<8x128xf32> to vector<8x128xbf16>
    %c0_170 = arith.constant 0 : index
    %c0_171 = arith.constant 0 : index
    %361 = vector.load %arg4[%c0_170, %c0_171] : memref<128x128xbf16, #tpu.memory_space<vmem>>, vector<128x128xbf16>
    %cst_172 = arith.constant dense<0.000000e+00> : vector<8x128xf32>
    %362 = tpu.matmul %360, %361, %cst_172 {dimension_numbers = #tpu.dot_dimension_numbers<[1], [0], [0], [1], [0, 0, 1, 1], [], []>} : vector<8x128xbf16>, vector<128x128xbf16>, vector<8x128xf32> -> vector<8x128xf32>
    %363 = vector.extract_strided_slice %6 {offsets = [56, 0], sizes = [8, 128], strides = [1, 1]} : vector<64x128xf32> to vector<8x128xf32>
    %364 = arith.addf %363, %362 : vector<8x128xf32>
    %cst_173 = arith.constant 5.000000e-01 : f32
    %365 = vector.broadcast %cst_173 : f32 to vector<8x128xf32>
    %366 = arith.mulf %365, %364 : vector<8x128xf32>
    %367 = math.tanh %366 : vector<8x128xf32>
    %cst_174 = arith.constant 5.000000e-01 : f32
    %368 = vector.broadcast %cst_174 : f32 to vector<8x128xf32>
    %369 = arith.mulf %368, %367 : vector<8x128xf32>
    %cst_175 = arith.constant 5.000000e-01 : f32
    %370 = vector.broadcast %cst_175 : f32 to vector<8x128xf32>
    %371 = arith.addf %369, %370 : vector<8x128xf32>
    %372 = math.tanh %364 : vector<8x128xf32>
    %cst_176 = arith.constant 0.000000e+00 : f32
    %373 = vector.broadcast %cst_176 : f32 to vector<8x128xf32>
    %374 = arith.select %12, %371, %373 : vector<8x128xi1>, vector<8x128xf32>
    %c96_i32_177 = arith.constant 96 : i32
    %375 = tpu.dynamic_rotate %371 by %c96_i32_177 dim 1 : vector<8x128xf32>, i32 -> vector<8x128xf32>
    %c64_i32_178 = arith.constant 64 : i32
    %376 = tpu.dynamic_rotate %372 by %c64_i32_178 dim 1 : vector<8x128xf32>, i32 -> vector<8x128xf32>
    %c32_i32_179 = arith.constant 32 : i32
    %377 = tpu.dynamic_rotate %371 by %c32_i32_179 dim 1 : vector<8x128xf32>, i32 -> vector<8x128xf32>
    %378 = arith.mulf %375, %331 : vector<8x128xf32>
    %379 = arith.mulf %374, %376 : vector<8x128xf32>
    %380 = arith.addf %378, %379 : vector<8x128xf32>
    %381 = math.tanh %380 : vector<8x128xf32>
    %382 = arith.mulf %377, %381 : vector<8x128xf32>
    %383 = arith.truncf %359 : vector<8x128xf32> to vector<8x128xbf16>
    %c0_180 = arith.constant 0 : index
    %c0_181 = arith.constant 0 : index
    %384 = vector.load %arg5[%c0_180, %c0_181] : memref<128x128xbf16, #tpu.memory_space<vmem>>, vector<128x128xbf16>
    %cst_182 = arith.constant dense<0.000000e+00> : vector<8x128xf32>
    %385 = tpu.matmul %383, %384, %cst_182 {dimension_numbers = #tpu.dot_dimension_numbers<[1], [0], [0], [1], [0, 0, 1, 1], [], []>} : vector<8x128xbf16>, vector<128x128xbf16>, vector<8x128xf32> -> vector<8x128xf32>
    %386 = arith.truncf %382 : vector<8x128xf32> to vector<8x128xbf16>
    %c0_183 = arith.constant 0 : index
    %c0_184 = arith.constant 0 : index
    %387 = vector.load %arg3[%c0_183, %c0_184] : memref<128x128xbf16, #tpu.memory_space<vmem>>, vector<128x128xbf16>
    %cst_185 = arith.constant dense<0.000000e+00> : vector<8x128xf32>
    %388 = tpu.matmul %386, %387, %cst_185 {dimension_numbers = #tpu.dot_dimension_numbers<[1], [0], [0], [1], [0, 0, 1, 1], [], []>} : vector<8x128xbf16>, vector<128x128xbf16>, vector<8x128xf32> -> vector<8x128xf32>
    %389 = arith.addf %388, %385 : vector<8x128xf32>
    %390 = arith.addf %389, %9 : vector<8x128xf32>
    %cst_186 = arith.constant 5.000000e-01 : f32
    %391 = vector.broadcast %cst_186 : f32 to vector<8x128xf32>
    %392 = arith.mulf %391, %390 : vector<8x128xf32>
    %393 = math.tanh %392 : vector<8x128xf32>
    %cst_187 = arith.constant 5.000000e-01 : f32
    %394 = vector.broadcast %cst_187 : f32 to vector<8x128xf32>
    %395 = arith.mulf %394, %393 : vector<8x128xf32>
    %cst_188 = arith.constant 5.000000e-01 : f32
    %396 = vector.broadcast %cst_188 : f32 to vector<8x128xf32>
    %397 = arith.addf %395, %396 : vector<8x128xf32>
    %398 = math.tanh %390 : vector<8x128xf32>
    %cst_189 = arith.constant 0.000000e+00 : f32
    %399 = vector.broadcast %cst_189 : f32 to vector<8x128xf32>
    %400 = arith.select %12, %397, %399 : vector<8x128xi1>, vector<8x128xf32>
    %c96_i32_190 = arith.constant 96 : i32
    %401 = tpu.dynamic_rotate %397 by %c96_i32_190 dim 1 : vector<8x128xf32>, i32 -> vector<8x128xf32>
    %c64_i32_191 = arith.constant 64 : i32
    %402 = tpu.dynamic_rotate %398 by %c64_i32_191 dim 1 : vector<8x128xf32>, i32 -> vector<8x128xf32>
    %c32_i32_192 = arith.constant 32 : i32
    %403 = tpu.dynamic_rotate %397 by %c32_i32_192 dim 1 : vector<8x128xf32>, i32 -> vector<8x128xf32>
    %404 = arith.mulf %401, %357 : vector<8x128xf32>
    %405 = arith.mulf %400, %402 : vector<8x128xf32>
    %406 = arith.addf %404, %405 : vector<8x128xf32>
    %407 = math.tanh %406 : vector<8x128xf32>
    %408 = arith.mulf %403, %407 : vector<8x128xf32>
    %409 = arith.truncf %408 : vector<8x128xf32> to vector<8x128xbf16>
    %c0_193 = arith.constant 0 : index
    %c0_194 = arith.constant 0 : index
    %410 = vector.load %arg8[%c0_193, %c0_194] : memref<128x128xbf16, #tpu.memory_space<vmem>>, vector<128x128xbf16>
    %cst_195 = arith.constant dense<0.000000e+00> : vector<8x128xf32>
    %411 = tpu.matmul %409, %410, %cst_195 {dimension_numbers = #tpu.dot_dimension_numbers<[1], [0], [0], [1], [0, 0, 1, 1], [], []>} : vector<8x128xbf16>, vector<128x128xbf16>, vector<8x128xf32> -> vector<8x128xf32>
    %c0_196 = arith.constant 0 : index
    %c0_197 = arith.constant 0 : index
    %412 = vector.load %arg9[%c0_196, %c0_197] : memref<1x128xf32, #tpu.memory_space<vmem>>, vector<1x128xf32>
    %413 = vector.broadcast %412 : vector<1x128xf32> to vector<8x128xf32>
    %414 = arith.addf %411, %413 : vector<8x128xf32>
    %c0_198 = arith.constant 0 : index
    %c0_199 = arith.constant 0 : index
    %415 = vector.load %arg10[%c0_198, %c0_199] : memref<8x128xf32, #tpu.memory_space<vmem>>, vector<8x128xf32>
    tpu.vector_store %arg10[%c0_198, %c0_199], %414 {strides = array<i32>} : memref<8x128xf32, #tpu.memory_space<vmem>>, vector<8x128xf32>,
    return
  }
  func.func @transform_0(%arg0: i32) -> (i32, i32) {
    %c0_i32 = arith.constant 0 : i32
    %c0_i32_0 = arith.constant 0 : i32
    %c0_i32_1 = arith.constant 0 : i32
    return %c0_i32, %c0_i32_0 : i32, i32
  }
  func.func @transform_1(%arg0: i32) -> (i32, i32) {
    %c0_i32 = arith.constant 0 : i32
    %c0_i32_0 = arith.constant 0 : i32
    %c0_i32_1 = arith.constant 0 : i32
    return %c0_i32, %c0_i32_0 : i32, i32
  }
  func.func @transform_2(%arg0: i32) -> (i32, i32) {
    %c0_i32 = arith.constant 0 : i32
    %c0_i32_0 = arith.constant 0 : i32
    %c0_i32_1 = arith.constant 0 : i32
    return %c0_i32, %c0_i32_0 : i32, i32
  }
  func.func @transform_3(%arg0: i32) -> (i32, i32) {
    %c0_i32 = arith.constant 0 : i32
    %c0_i32_0 = arith.constant 0 : i32
    %c0_i32_1 = arith.constant 0 : i32
    return %c0_i32, %c0_i32_0 : i32, i32
  }
  func.func @transform_4(%arg0: i32) -> (i32, i32) {
    %c0_i32 = arith.constant 0 : i32
    %c0_i32_0 = arith.constant 0 : i32
    %c0_i32_1 = arith.constant 0 : i32
    return %c0_i32, %c0_i32_0 : i32, i32
  }
  func.func @transform_5(%arg0: i32) -> (i32, i32) {
    %c0_i32 = arith.constant 0 : i32
    %c0_i32_0 = arith.constant 0 : i32
    %c0_i32_1 = arith.constant 0 : i32
    return %c0_i32, %c0_i32_0 : i32, i32
  }
  func.func @transform_6(%arg0: i32) -> (i32, i32) {
    %c0_i32 = arith.constant 0 : i32
    %c0_i32_0 = arith.constant 0 : i32
    %c0_i32_1 = arith.constant 0 : i32
    return %c0_i32, %c0_i32_0 : i32, i32
  }
  func.func @transform_7(%arg0: i32) -> (i32, i32) {
    %c0_i32 = arith.constant 0 : i32
    %c0_i32_0 = arith.constant 0 : i32
    %c0_i32_1 = arith.constant 0 : i32
    return %c0_i32, %c0_i32_0 : i32, i32
  }
  func.func @transform_8(%arg0: i32) -> (i32, i32) {
    %c0_i32 = arith.constant 0 : i32
    %c0_i32_0 = arith.constant 0 : i32
    %c0_i32_1 = arith.constant 0 : i32
    return %c0_i32, %c0_i32_0 : i32, i32
  }
  func.func @transform_9(%arg0: i32) -> (i32, i32) {
    %c0_i32 = arith.constant 0 : i32
    %c0_i32_0 = arith.constant 0 : i32
    %c0_i32_1 = arith.constant 0 : i32
    return %c0_i32, %c0_i32_0 : i32, i32
  }
}

</mosaic_0001>

<llo_original>
// kernel: tpu_custom_call.1
$region0: #{tpu_custom_call.1}
  #allocation0 [shape = 'u32[]', space=smem, size = 0x4, offset = 0x4, fixed_abs, tag = 'smem constant byte address 0x4 - core index']
  #allocation1 [shape = 'u32[144,128]{1,0:T(1,128)}', space=vmem, size = 0x12000, scoped, tag = 'internal scratch']
  %s0 = inlined_call_operand.hbm [shape: bf16[64,128], index: 0, kind: input, shape index: {}]
  %s1 = inlined_call_operand.hbm [shape: bf16[128,128], index: 1, kind: input, shape index: {}]
  %s2 = inlined_call_operand.hbm [shape: bf16[128,128], index: 2, kind: input, shape index: {}]
  %s3 = inlined_call_operand.hbm [shape: bf16[128,128], index: 3, kind: input, shape index: {}]
  %s4 = inlined_call_operand.hbm [shape: bf16[128,128], index: 4, kind: input, shape index: {}]
  %s5 = inlined_call_operand.vmem [shape: f32[1,128], index: 5, kind: input, shape index: {}]
  %s6 = inlined_call_operand.vmem [shape: f32[1,128], index: 6, kind: input, shape index: {}]
  %s7 = inlined_call_operand.hbm [shape: bf16[128,128], index: 7, kind: input, shape index: {}]
  %s8 = inlined_call_operand.vmem [shape: f32[1,128], index: 8, kind: input, shape index: {}]
  %s9 = inlined_call_operand.hbm [shape: f32[8,128], index: 9, kind: output, shape index: {}]
  %s10 = sld [smem:[#allocation0]]
  $region70: #{tpu_custom_call.1} parent=0
    _
  %s12 = ssub.s32 1, %s10
  %s13 = scalar_select 0, %s12, %s10
  $region1: #{tpu_custom_call.1} parent=0
    #allocation2 [shape = 'u8[16384]{0}', space=vmem, size = 0x4000, scoped, tag = 'input window, operand 0, single buffered']
    #allocation3 [shape = 's32[1]{0}', space=sflag, size = 0x4, scoped, tag = 'scoped memory for tpu_custom_call.1']
    #allocation4 [shape = 's32[1]{0}', space=sflag, size = 0x4, scoped, tag = 'scoped memory for tpu_custom_call.1']
    #allocation5 [shape = 'u8[32768]{0}', space=vmem, size = 0x8000, scoped, tag = 'input window, operand 1, single buffered']
    #allocation6 [shape = 's32[1]{0}', space=sflag, size = 0x4, scoped, tag = 'scoped memory for tpu_custom_call.1']
    #allocation7 [shape = 'u8[32768]{0}', space=vmem, size = 0x8000, scoped, tag = 'input window, operand 2, single buffered']
    #allocation8 [shape = 'u8[32768]{0}', space=vmem, size = 0x8000, scoped, tag = 'input window, operand 3, single buffered']
    #allocation9 [shape = 's32[1]{0}', space=sflag, size = 0x4, scoped, tag = 'scoped memory for tpu_custom_call.1']
    #allocation10 [shape = 'u8[32768]{0}', space=vmem, size = 0x8000, scoped, tag = 'input window, operand 4, single buffered']
    #allocation11 [shape = 'u8[32768]{0}', space=vmem, size = 0x8000, scoped, tag = 'input window, operand 7, single buffered']
    #allocation12 [shape = 's32[1]{0}', space=sflag, size = 0x4, scoped, tag = 'scoped memory for tpu_custom_call.1']
    #allocation13 [shape = 'u8[4096]{0}', space=vmem, size = 0x1000, scoped, tag = 'output window, operand 0, single buffered']
    %14 = vsyncpa [#allocation3], 0
    %15 = vsyncpa [#allocation6], 0
    %16 = vsyncpa [#allocation9], 0
    %17 = vsyncpa [#allocation12], 0
    %18 = vsyncpa [#allocation4], 0
    // Predicated region
    $region2: #{tpu_custom_call.1} parent=1 // pred_check
      _
    $region3: #{tpu_custom_call.1} parent=1 // pred_check_branch
      %20 = sbr.rel (0) target = $region5
    $region4: #{tpu_custom_call.1} parent=1 // pred_region
      %s22 = ssub.s32 512, 512
      %23 = vsyncadd [#allocation3], %s22
      %s24 = sshll.u32 [#allocation2], 4
      %s25 = int_to_ptr.vmem [resolvable:$true] %s24
      %30 = dma.hbm_to_vmem [thread:$0]  %s0, 512, %s25, [#allocation3], 64, 64, 4
    $region5: #{tpu_custom_call.1} parent=1 // pred_fallthru
      _
    // Predicated region
    $region6: #{tpu_custom_call.1} parent=1 // pred_check
      _
    $region7: #{tpu_custom_call.1} parent=1 // pred_check_branch
      %32 = sbr.rel (0) target = $region9
    $region8: #{tpu_custom_call.1} parent=1 // pred_region
      %s34 = ssub.s32 1024, 1024
      %35 = vsyncadd [#allocation6], %s34
      %s36 = sshll.u32 [#allocation5], 4
      %s37 = int_to_ptr.vmem [resolvable:$true] %s36
      %42 = dma.hbm_to_vmem [thread:$0]  %s1, 1024, %s37, [#allocation6], 64, 64, 4
    $region9: #{tpu_custom_call.1} parent=1 // pred_fallthru
      _
    // Predicated region
    $region10: #{tpu_custom_call.1} parent=1 // pred_check
      _
    $region11: #{tpu_custom_call.1} parent=1 // pred_check_branch
      %44 = sbr.rel (0) target = $region13
    $region12: #{tpu_custom_call.1} parent=1 // pred_region
      %s46 = ssub.s32 1024, 1024
      %47 = vsyncadd [#allocation6], %s46
      %s48 = sshll.u32 [#allocation7], 4
      %s49 = int_to_ptr.vmem [resolvable:$true] %s48
      %54 = dma.hbm_to_vmem [thread:$0]  %s2, 1024, %s49, [#allocation6], 64, 64, 4
    $region13: #{tpu_custom_call.1} parent=1 // pred_fallthru
      _
    // Predicated region
    $region14: #{tpu_custom_call.1} parent=1 // pred_check
      _
    $region15: #{tpu_custom_call.1} parent=1 // pred_check_branch
      %56 = sbr.rel (0) target = $region17
    $region16: #{tpu_custom_call.1} parent=1 // pred_region
      %s58 = ssub.s32 1024, 1024
      %59 = vsyncadd [#allocation9], %s58
      %s60 = sshll.u32 [#allocation8], 4
      %s61 = int_to_ptr.vmem [resolvable:$true] %s60
      %66 = dma.hbm_to_vmem [thread:$0]  %s3, 1024, %s61, [#allocation9], 64, 64, 4
    $region17: #{tpu_custom_call.1} parent=1 // pred_fallthru
      _
    // Predicated region
    $region18: #{tpu_custom_call.1} parent=1 // pred_check
      _
    $region19: #{tpu_custom_call.1} parent=1 // pred_check_branch
      %68 = sbr.rel (0) target = $region21
    $region20: #{tpu_custom_call.1} parent=1 // pred_region
      %s70 = ssub.s32 1024, 1024
      %71 = vsyncadd [#allocation9], %s70
      %s72 = sshll.u32 [#allocation10], 4
      %s73 = int_to_ptr.vmem [resolvable:$true] %s72
      %78 = dma.hbm_to_vmem [thread:$0]  %s4, 1024, %s73, [#allocation9], 64, 64, 4
    $region21: #{tpu_custom_call.1} parent=1 // pred_fallthru
      _
    // Predicated region
    $region22: #{tpu_custom_call.1} parent=1 // pred_check
      _
    $region23: #{tpu_custom_call.1} parent=1 // pred_check_branch
      %80 = sbr.rel (0) target = $region25
    $region24: #{tpu_custom_call.1} parent=1 // pred_region
      _
    $region25: #{tpu_custom_call.1} parent=1 // pred_fallthru
      _
    // Predicated region
    $region26: #{tpu_custom_call.1} parent=1 // pred_check
      _
    $region27: #{tpu_custom_call.1} parent=1 // pred_check_branch
      %82 = sbr.rel (0) target = $region29
    $region28: #{tpu_custom_call.1} parent=1 // pred_region
      _
    $region29: #{tpu_custom_call.1} parent=1 // pred_fallthru
      _
    // Predicated region
    $region30: #{tpu_custom_call.1} parent=1 // pred_check
      _
    $region31: #{tpu_custom_call.1} parent=1 // pred_check_branch
      %84 = sbr.rel (0) target = $region33
    $region32: #{tpu_custom_call.1} parent=1 // pred_region
      %s86 = ssub.s32 1024, 1024
      %87 = vsyncadd [#allocation12], %s86
      %s88 = sshll.u32 [#allocation11], 4
      %s89 = int_to_ptr.vmem [resolvable:$true] %s88
      %94 = dma.hbm_to_vmem [thread:$0]  %s7, 1024, %s89, [#allocation12], 64, 64, 4
    $region33: #{tpu_custom_call.1} parent=1 // pred_fallthru
      _
    // Predicated region
    $region34: #{tpu_custom_call.1} parent=1 // pred_check
      _
    $region35: #{tpu_custom_call.1} parent=1 // pred_check_branch
      %96 = sbr.rel (0) target = $region37
    $region36: #{tpu_custom_call.1} parent=1 // pred_region
      _
    $region37: #{tpu_custom_call.1} parent=1 // pred_fallthru
      _
    // Predicated region
    $region38: #{tpu_custom_call.1} parent=1 // pred_check
      _
    $region39: #{tpu_custom_call.1} parent=1 // pred_check_branch
      %98 = sbr.rel (0) target = $region41
    $region40: #{tpu_custom_call.1} parent=1 // pred_region
      %99 = dma.done [#allocation3], 512
    $region41: #{tpu_custom_call.1} parent=1 // pred_fallthru
      _
    // Predicated region
    $region42: #{tpu_custom_call.1} parent=1 // pred_check
      _
    $region43: #{tpu_custom_call.1} parent=1 // pred_check_branch
      %101 = sbr.rel (0) target = $region45
    $region44: #{tpu_custom_call.1} parent=1 // pred_region
      %102 = dma.done [#allocation6], 1024
    $region45: #{tpu_custom_call.1} parent=1 // pred_fallthru
      _
    // Predicated region
    $region46: #{tpu_custom_call.1} parent=1 // pred_check
      _
    $region47: #{tpu_custom_call.1} parent=1 // pred_check_branch
      %104 = sbr.rel (0) target = $region49
    $region48: #{tpu_custom_call.1} parent=1 // pred_region
      %105 = dma.done [#allocation6], 1024
    $region49: #{tpu_custom_call.1} parent=1 // pred_fallthru
      _
    // Predicated region
    $region50: #{tpu_custom_call.1} parent=1 // pred_check
      _
    $region51: #{tpu_custom_call.1} parent=1 // pred_check_branch
      %107 = sbr.rel (0) target = $region53
    $region52: #{tpu_custom_call.1} parent=1 // pred_region
      %108 = dma.done [#allocation9], 1024
    $region53: #{tpu_custom_call.1} parent=1 // pred_fallthru
      _
    // Predicated region
    $region54: #{tpu_custom_call.1} parent=1 // pred_check
      _
    $region55: #{tpu_custom_call.1} parent=1 // pred_check_branch
      %110 = sbr.rel (0) target = $region57
    $region56: #{tpu_custom_call.1} parent=1 // pred_region
      %111 = dma.done [#allocation9], 1024
    $region57: #{tpu_custom_call.1} parent=1 // pred_fallthru
      _
    // Predicated region
    $region58: #{tpu_custom_call.1} parent=1 // pred_check
      _
    $region59: #{tpu_custom_call.1} parent=1 // pred_check_branch
      %113 = sbr.rel (0) target = $region61
    $region60: #{tpu_custom_call.1} parent=1 // pred_region
      %114 = dma.done [#allocation12], 1024
    $region61: #{tpu_custom_call.1} parent=1 // pred_fallthru
      _
    %v116 = vld [vmem:[#allocation2] sm:$0xf]
    %v117 = vld [vmem:[#allocation2 + $0x4] sm:$0xf]
    %v118 = vld [vmem:[#allocation2 + $0x8] sm:$0xf]
    %v119 = vld [vmem:[#allocation2 + $0xc] sm:$0xf]
    %v120 = vld [vmem:[#allocation2 + $0x10] sm:$0xf]
    %v121 = vld [vmem:[#allocation2 + $0x14] sm:$0xf]
    %v122 = vld [vmem:[#allocation2 + $0x18] sm:$0xf]
    %v123 = vld [vmem:[#allocation2 + $0x1c] sm:$0xf]
    %v124 = vld [vmem:[#allocation5] sm:$0xf]
    %v125 = vld [vmem:[#allocation5 + $0x4] sm:$0xf]
    %v126 = vld [vmem:[#allocation5 + $0x8] sm:$0xf]
    %v127 = vld [vmem:[#allocation5 + $0xc] sm:$0xf]
    %v128 = vld [vmem:[#allocation5 + $0x10] sm:$0xf]
    %v129 = vld [vmem:[#allocation5 + $0x14] sm:$0xf]
    %v130 = vld [vmem:[#allocation5 + $0x18] sm:$0xf]
    %v131 = vld [vmem:[#allocation5 + $0x1c] sm:$0xf]
    %v132 = vld [vmem:[#allocation5 + $0x20] sm:$0xf]
    %v133 = vld [vmem:[#allocation5 + $0x24] sm:$0xf]
    %v134 = vld [vmem:[#allocation5 + $0x28] sm:$0xf]
    %v135 = vld [vmem:[#allocation5 + $0x2c] sm:$0xf]
    %v136 = vld [vmem:[#allocation5 + $0x30] sm:$0xf]
    %v137 = vld [vmem:[#allocation5 + $0x34] sm:$0xf]
    %v138 = vld [vmem:[#allocation5 + $0x38] sm:$0xf]
    %v139 = vld [vmem:[#allocation5 + $0x3c] sm:$0xf]
    %v140 = vld [vmem:[%s5] sm:$0x1]
    %v142 = vlaneseq
    %v143 = vshrl.u32 %v142, 7
    %v144 = vsub.s32 0, %v143
    %v145 = vrot.slane %v140, %v144
    %v155 = vunpack.c.l.b16 %v116
    %v156 = vunpack.c.l.b16 %v117
    %v157 = vunpack.c.l.b16 %v118
    %v158 = vunpack.c.l.b16 %v119
    %v159 = vunpack.c.l.b16 %v120
    %v160 = vunpack.c.l.b16 %v121
    %v161 = vunpack.c.l.b16 %v122
    %v162 = vunpack.c.l.b16 %v123
    %v163 = vpack.c.b16 %v156, %v155
    %v164 = vpack.c.b16 %v158, %v157
    %v165 = vpack.c.b16 %v160, %v159
    %v166 = vpack.c.b16 %v162, %v161
    %v187 = vunpack.c.l.b16 %v124
    %v188 = vunpack.c.l.b16 %v125
    %v189 = vunpack.c.l.b16 %v126
    %v190 = vunpack.c.l.b16 %v127
    %v191 = vunpack.c.l.b16 %v128
    %v192 = vunpack.c.l.b16 %v129
    %v193 = vunpack.c.l.b16 %v130
    %v194 = vunpack.c.l.b16 %v131
    %v195 = vunpack.c.l.b16 %v132
    %v196 = vunpack.c.l.b16 %v133
    %v197 = vunpack.c.l.b16 %v134
    %v198 = vunpack.c.l.b16 %v135
    %v199 = vunpack.c.l.b16 %v136
    %v200 = vunpack.c.l.b16 %v137
    %v201 = vunpack.c.l.b16 %v138
    %v202 = vunpack.c.l.b16 %v139
    %v203 = vpack.c.b16 %v188, %v187
    %v204 = vpack.c.b16 %v190, %v189
    %v205 = vpack.c.b16 %v192, %v191
    %v206 = vpack.c.b16 %v194, %v193
    %v207 = vpack.c.b16 %v196, %v195
    %v208 = vpack.c.b16 %v198, %v197
    %v209 = vpack.c.b16 %v200, %v199
    %v210 = vpack.c.b16 %v202, %v201
    %219 = vmatprep.subr.bf16.mxu0 0
    %220 = vmatpush1.bf16.msra.mxu0 %v210
    %221 = vmatprep.subr.bf16.mxu0 0
    %222 = vmatpush1.bf16.msra.mxu0 %v209
    %223 = vmatprep.subr.bf16.mxu0 0
    %224 = vmatpush1.bf16.msra.mxu0 %v208
    %225 = vmatprep.subr.bf16.mxu0 0
    %226 = vmatpush1.bf16.msra.mxu0 %v207
    %227 = vmatprep.subr.bf16.mxu0 0
    %228 = vmatpush1.bf16.msra.mxu0 %v206
    %229 = vmatprep.subr.bf16.mxu0 0
    %230 = vmatpush1.bf16.msra.mxu0 %v205
    %231 = vmatprep.subr.bf16.mxu0 0
    %232 = vmatpush1.bf16.msra.mxu0 %v204
    %233 = vmatprep.subr.bf16.mxu0 0
    %234 = vmatpush1.bf16.msra.mxu0 %v203
    %235 = vmatprep.subr.bf16.mxu0 0
    %236 = vmatpush2.bf16.msra.mxu0 0
    %237 = vmatprep.subr.bf16.mxu0 0
    %238 = vmatpush2.bf16.msra.mxu0 0
    %239 = vmatprep.subr.bf16.mxu0 0
    %240 = vmatpush2.bf16.msra.mxu0 0
    %241 = vmatprep.subr.bf16.mxu0 0
    %242 = vmatpush2.bf16.msra.mxu0 0
    %243 = vmatprep.subr.bf16.mxu0 0
    %244 = vmatpush2.bf16.msra.mxu0 0
    %245 = vmatprep.subr.bf16.mxu0 0
    %246 = vmatpush2.bf16.msra.mxu0 0
    %247 = vmatprep.subr.bf16.mxu0 0
    %248 = vmatpush2.bf16.msra.mxu0 0
    %249 = vmatprep.subr.bf16.mxu0 0
    %250 = vmatpush2.bf16.msra.mxu0 0
    %251 = vmatprep.mubr.bf16.mxu0 0
    %252 = vmatmul.mubr.bf16.gmra.mxu0 %v163
    %v253 = vpop.f32.mrf.mxu0
    %v254 = vadd.f32 %v145, %v253
    %v255 = vpop.f32.mrf.mxu0
    %v256 = vpop.f32.mrf.mxu0
    %v257 = vadd.f32 %v145, %v256
    %v258 = vpop.f32.mrf.mxu0
    %259 = vmatprep.mubr.bf16.mxu0 0
    %260 = vmatmul.mubr.bf16.gmra.mxu0 %v164
    %v261 = vpop.f32.mrf.mxu0
    %v262 = vadd.f32 %v145, %v261
    %v263 = vpop.f32.mrf.mxu0
    %v264 = vpop.f32.mrf.mxu0
    %v265 = vadd.f32 %v145, %v264
    %v266 = vpop.f32.mrf.mxu0
    %267 = vmatprep.mubr.bf16.mxu0 0
    %268 = vmatmul.mubr.bf16.gmra.mxu0 %v165
    %v269 = vpop.f32.mrf.mxu0
    %v270 = vadd.f32 %v145, %v269
    %v271 = vpop.f32.mrf.mxu0
    %v272 = vpop.f32.mrf.mxu0
    %v273 = vadd.f32 %v145, %v272
    %v274 = vpop.f32.mrf.mxu0
    %275 = vmatprep.mubr.bf16.mxu0 0
    %276 = vmatmul.mubr.bf16.gmra.mxu0 %v166
    %v277 = vpop.f32.mrf.mxu0
    %v278 = vadd.f32 %v145, %v277
    %v279 = vpop.f32.mrf.mxu0
    %v280 = vpop.f32.mrf.mxu0
    %v281 = vadd.f32 %v145, %v280
    %v282 = vpop.f32.mrf.mxu0
    %283 = vdwg.mxu0
    %v284 = vld [vmem:[%s6] sm:$0x1]
    %v286 = vlaneseq
    %v287 = vshrl.u32 %v286, 7
    %v288 = vsub.s32 0, %v287
    %v289 = vrot.slane %v284, %v288
    %v291 = vlaneseq
    %v292 = vand.u32 %v291, 127
    %vm293 = vcmp.lt.s32.totalorder %v292, 32
    %v294 = vld [vmem:[#allocation8] sm:$0xf]
    %v295 = vld [vmem:[#allocation8 + $0x4] sm:$0xf]
    %v296 = vld [vmem:[#allocation8 + $0x8] sm:$0xf]
    %v297 = vld [vmem:[#allocation8 + $0xc] sm:$0xf]
    %v298 = vld [vmem:[#allocation8 + $0x10] sm:$0xf]
    %v299 = vld [vmem:[#allocation8 + $0x14] sm:$0xf]
    %v300 = vld [vmem:[#allocation8 + $0x18] sm:$0xf]
    %v301 = vld [vmem:[#allocation8 + $0x1c] sm:$0xf]
    %v302 = vld [vmem:[#allocation8 + $0x20] sm:$0xf]
    %v303 = vld [vmem:[#allocation8 + $0x24] sm:$0xf]
    %v304 = vld [vmem:[#allocation8 + $0x28] sm:$0xf]
    %v305 = vld [vmem:[#allocation8 + $0x2c] sm:$0xf]
    %v306 = vld [vmem:[#allocation8 + $0x30] sm:$0xf]
    %v307 = vld [vmem:[#allocation8 + $0x34] sm:$0xf]
    %v308 = vld [vmem:[#allocation8 + $0x38] sm:$0xf]
    %v309 = vld [vmem:[#allocation8 + $0x3c] sm:$0xf]
    %v326 = vunpack.c.l.b16 %v294
    %v327 = vunpack.c.l.b16 %v295
    %v328 = vunpack.c.l.b16 %v296
    %v329 = vunpack.c.l.b16 %v297
    %v330 = vunpack.c.l.b16 %v298
    %v331 = vunpack.c.l.b16 %v299
    %v332 = vunpack.c.l.b16 %v300
    %v333 = vunpack.c.l.b16 %v301
    %v334 = vunpack.c.l.b16 %v302
    %v335 = vunpack.c.l.b16 %v303
    %v336 = vunpack.c.l.b16 %v304
    %v337 = vunpack.c.l.b16 %v305
    %v338 = vunpack.c.l.b16 %v306
    %v339 = vunpack.c.l.b16 %v307
    %v340 = vunpack.c.l.b16 %v308
    %v341 = vunpack.c.l.b16 %v309
    %v342 = vpack.c.b16 %v327, %v326
    %v343 = vpack.c.b16 %v329, %v328
    %v344 = vpack.c.b16 %v331, %v330
    %v345 = vpack.c.b16 %v333, %v332
    %v346 = vpack.c.b16 %v335, %v334
    %v347 = vpack.c.b16 %v337, %v336
    %v348 = vpack.c.b16 %v339, %v338
    %v349 = vpack.c.b16 %v341, %v340
    %358 = vmatprep.subr.bf16.mxu0 0
    %359 = vmatpush1.bf16.msra.mxu0 %v349
    %360 = vmatprep.subr.bf16.mxu0 0
    %361 = vmatpush1.bf16.msra.mxu0 %v348
    %362 = vmatprep.subr.bf16.mxu0 0
    %363 = vmatpush1.bf16.msra.mxu0 %v347
    %364 = vmatprep.subr.bf16.mxu0 0
    %365 = vmatpush1.bf16.msra.mxu0 %v346
    %366 = vmatprep.subr.bf16.mxu0 0
    %367 = vmatpush1.bf16.msra.mxu0 %v345
    %368 = vmatprep.subr.bf16.mxu0 0
    %369 = vmatpush1.bf16.msra.mxu0 %v344
    %370 = vmatprep.subr.bf16.mxu0 0
    %371 = vmatpush1.bf16.msra.mxu0 %v343
    %372 = vmatprep.subr.bf16.mxu0 0
    %373 = vmatpush1.bf16.msra.mxu0 %v342
    %374 = vmatprep.subr.bf16.mxu0 0
    %375 = vmatpush2.bf16.msra.mxu0 0
    %376 = vmatprep.subr.bf16.mxu0 0
    %377 = vmatpush2.bf16.msra.mxu0 0
    %378 = vmatprep.subr.bf16.mxu0 0
    %379 = vmatpush2.bf16.msra.mxu0 0
    %380 = vmatprep.subr.bf16.mxu0 0
    %381 = vmatpush2.bf16.msra.mxu0 0
    %382 = vmatprep.subr.bf16.mxu0 0
    %383 = vmatpush2.bf16.msra.mxu0 0
    %384 = vmatprep.subr.bf16.mxu0 0
    %385 = vmatpush2.bf16.msra.mxu0 0
    %386 = vmatprep.subr.bf16.mxu0 0
    %387 = vmatpush2.bf16.msra.mxu0 0
    %388 = vmatprep.subr.bf16.mxu0 0
    %389 = vmatpush2.bf16.msra.mxu0 0
    %390 = vmatprep.mubr.bf16.mxu0 0
    %391 = vmatmul.mubr.bf16.gmra.mxu0 0
    %v392 = vpop.f32.mrf.mxu0
    %v393 = vadd.f32 0.0, %v392
    %v394 = vpop.f32.mrf.mxu0
    %v395 = vpop.f32.mrf.mxu0
    %v396 = vpop.f32.mrf.mxu0
    %397 = vdwg.mxu0
    %v398 = vadd.f32 %v254, %v393
    %v399 = vmul.f32 %v398, 0.5
    %v400 = vtanh.pop %v399
    %v401 = vmul.f32 %v400, 0.5
    %v402 = vadd.f32 %v401, 0.5
    %v403 = vtanh.pop %v398
    %v404 = vsel %vm293, %v402, 0.0
    %405 = vrot.lane.b32.xlu0 %v402, 96
    %v406 = vpop.permute.xlu0 %405
    %407 = vrot.lane.b32.xlu0 %v403, 64
    %v408 = vpop.permute.xlu0 %407
    %409 = vrot.lane.b32.xlu0 %v402, 32
    %v410 = vpop.permute.xlu0 %409
    %v411 = vmul.f32 %v406, 0.0
    %v412 = vmul.f32 %v404, %v408
    %v413 = vadd.f32 %v411, %v412
    %v414 = vtanh.pop %v413
    %v415 = vmul.f32 %v410, %v414
    %v416 = vld [vmem:[#allocation10] sm:$0xf]
    %v417 = vld [vmem:[#allocation10 + $0x4] sm:$0xf]
    %v418 = vld [vmem:[#allocation10 + $0x8] sm:$0xf]
    %v419 = vld [vmem:[#allocation10 + $0xc] sm:$0xf]
    %v420 = vld [vmem:[#allocation10 + $0x10] sm:$0xf]
    %v421 = vld [vmem:[#allocation10 + $0x14] sm:$0xf]
    %v422 = vld [vmem:[#allocation10 + $0x18] sm:$0xf]
    %v423 = vld [vmem:[#allocation10 + $0x1c] sm:$0xf]
    %v424 = vld [vmem:[#allocation10 + $0x20] sm:$0xf]
    %v425 = vld [vmem:[#allocation10 + $0x24] sm:$0xf]
    %v426 = vld [vmem:[#allocation10 + $0x28] sm:$0xf]
    %v427 = vld [vmem:[#allocation10 + $0x2c] sm:$0xf]
    %v428 = vld [vmem:[#allocation10 + $0x30] sm:$0xf]
    %v429 = vld [vmem:[#allocation10 + $0x34] sm:$0xf]
    %v430 = vld [vmem:[#allocation10 + $0x38] sm:$0xf]
    %v431 = vld [vmem:[#allocation10 + $0x3c] sm:$0xf]
    %v448 = vunpack.c.l.b16 %v416
    %v449 = vunpack.c.l.b16 %v417
    %v450 = vunpack.c.l.b16 %v418
    %v451 = vunpack.c.l.b16 %v419
    %v452 = vunpack.c.l.b16 %v420
    %v453 = vunpack.c.l.b16 %v421
    %v454 = vunpack.c.l.b16 %v422
    %v455 = vunpack.c.l.b16 %v423
    %v456 = vunpack.c.l.b16 %v424
    %v457 = vunpack.c.l.b16 %v425
    %v458 = vunpack.c.l.b16 %v426
    %v459 = vunpack.c.l.b16 %v427
    %v460 = vunpack.c.l.b16 %v428
    %v461 = vunpack.c.l.b16 %v429
    %v462 = vunpack.c.l.b16 %v430
    %v463 = vunpack.c.l.b16 %v431
    %v464 = vpack.c.b16 %v449, %v448
    %v465 = vpack.c.b16 %v451, %v450
    %v466 = vpack.c.b16 %v453, %v452
    %v467 = vpack.c.b16 %v455, %v454
    %v468 = vpack.c.b16 %v457, %v456
    %v469 = vpack.c.b16 %v459, %v458
    %v470 = vpack.c.b16 %v461, %v460
    %v471 = vpack.c.b16 %v463, %v462
    %480 = vmatprep.subr.bf16.mxu0 0
    %481 = vmatpush1.bf16.msra.mxu0 %v471
    %482 = vmatprep.subr.bf16.mxu0 0
    %483 = vmatpush1.bf16.msra.mxu0 %v470
    %484 = vmatprep.subr.bf16.mxu0 0
    %485 = vmatpush1.bf16.msra.mxu0 %v469
    %486 = vmatprep.subr.bf16.mxu0 0
    %487 = vmatpush1.bf16.msra.mxu0 %v468
    %488 = vmatprep.subr.bf16.mxu0 0
    %489 = vmatpush1.bf16.msra.mxu0 %v467
    %490 = vmatprep.subr.bf16.mxu0 0
    %491 = vmatpush1.bf16.msra.mxu0 %v466
    %492 = vmatprep.subr.bf16.mxu0 0
    %493 = vmatpush1.bf16.msra.mxu0 %v465
    %494 = vmatprep.subr.bf16.mxu0 0
    %495 = vmatpush1.bf16.msra.mxu0 %v464
    %496 = vmatprep.subr.bf16.mxu0 0
    %497 = vmatpush2.bf16.msra.mxu0 0
    %498 = vmatprep.subr.bf16.mxu0 0
    %499 = vmatpush2.bf16.msra.mxu0 0
    %500 = vmatprep.subr.bf16.mxu0 0
    %501 = vmatpush2.bf16.msra.mxu0 0
    %502 = vmatprep.subr.bf16.mxu0 0
    %503 = vmatpush2.bf16.msra.mxu0 0
    %504 = vmatprep.subr.bf16.mxu0 0
    %505 = vmatpush2.bf16.msra.mxu0 0
    %506 = vmatprep.subr.bf16.mxu0 0
    %507 = vmatpush2.bf16.msra.mxu0 0
    %508 = vmatprep.subr.bf16.mxu0 0
    %509 = vmatpush2.bf16.msra.mxu0 0
    %510 = vmatprep.subr.bf16.mxu0 0
    %511 = vmatpush2.bf16.msra.mxu0 0
    %512 = vmatprep.mubr.bf16.mxu0 0
    %513 = vmatmul.mubr.bf16.gmra.mxu0 0
    %v514 = vpop.f32.mrf.mxu0
    %v515 = vadd.f32 0.0, %v514
    %v516 = vpop.f32.mrf.mxu0
    %v517 = vpop.f32.mrf.mxu0
    %v518 = vpop.f32.mrf.mxu0
    %519 = vdwg.mxu0
    %v520 = vpack.c.bf16 %v415, %v415
    %v521 = vld [vmem:[#allocation7] sm:$0xf]
    %v522 = vld [vmem:[#allocation7 + $0x4] sm:$0xf]
    %v523 = vld [vmem:[#allocation7 + $0x8] sm:$0xf]
    %v524 = vld [vmem:[#allocation7 + $0xc] sm:$0xf]
    %v525 = vld [vmem:[#allocation7 + $0x10] sm:$0xf]
    %v526 = vld [vmem:[#allocation7 + $0x14] sm:$0xf]
    %v527 = vld [vmem:[#allocation7 + $0x18] sm:$0xf]
    %v528 = vld [vmem:[#allocation7 + $0x1c] sm:$0xf]
    %v529 = vld [vmem:[#allocation7 + $0x20] sm:$0xf]
    %v530 = vld [vmem:[#allocation7 + $0x24] sm:$0xf]
    %v531 = vld [vmem:[#allocation7 + $0x28] sm:$0xf]
    %v532 = vld [vmem:[#allocation7 + $0x2c] sm:$0xf]
    %v533 = vld [vmem:[#allocation7 + $0x30] sm:$0xf]
    %v534 = vld [vmem:[#allocation7 + $0x34] sm:$0xf]
    %v535 = vld [vmem:[#allocation7 + $0x38] sm:$0xf]
    %v536 = vld [vmem:[#allocation7 + $0x3c] sm:$0xf]
    %v553 = vunpack.c.l.b16 %v521
    %v554 = vunpack.c.l.b16 %v522
    %v555 = vunpack.c.l.b16 %v523
    %v556 = vunpack.c.l.b16 %v524
    %v557 = vunpack.c.l.b16 %v525
    %v558 = vunpack.c.l.b16 %v526
    %v559 = vunpack.c.l.b16 %v527
    %v560 = vunpack.c.l.b16 %v528
    %v561 = vunpack.c.l.b16 %v529
    %v562 = vunpack.c.l.b16 %v530
    %v563 = vunpack.c.l.b16 %v531
    %v564 = vunpack.c.l.b16 %v532
    %v565 = vunpack.c.l.b16 %v533
    %v566 = vunpack.c.l.b16 %v534
    %v567 = vunpack.c.l.b16 %v535
    %v568 = vunpack.c.l.b16 %v536
    %v569 = vpack.c.b16 %v554, %v553
    %v570 = vpack.c.b16 %v556, %v555
    %v571 = vpack.c.b16 %v558, %v557
    %v572 = vpack.c.b16 %v560, %v559
    %v573 = vpack.c.b16 %v562, %v561
    %v574 = vpack.c.b16 %v564, %v563
    %v575 = vpack.c.b16 %v566, %v565
    %v576 = vpack.c.b16 %v568, %v567
    %585 = vmatprep.subr.bf16.mxu0 0
    %586 = vmatpush1.bf16.msra.mxu0 %v576
    %587 = vmatprep.subr.bf16.mxu0 0
    %588 = vmatpush1.bf16.msra.mxu0 %v575
    %589 = vmatprep.subr.bf16.mxu0 0
    %590 = vmatpush1.bf16.msra.mxu0 %v574
    %591 = vmatprep.subr.bf16.mxu0 0
    %592 = vmatpush1.bf16.msra.mxu0 %v573
    %593 = vmatprep.subr.bf16.mxu0 0
    %594 = vmatpush1.bf16.msra.mxu0 %v572
    %595 = vmatprep.subr.bf16.mxu0 0
    %596 = vmatpush1.bf16.msra.mxu0 %v571
    %597 = vmatprep.subr.bf16.mxu0 0
    %598 = vmatpush1.bf16.msra.mxu0 %v570
    %599 = vmatprep.subr.bf16.mxu0 0
    %600 = vmatpush1.bf16.msra.mxu0 %v569
    %601 = vmatprep.subr.bf16.mxu0 0
    %602 = vmatpush2.bf16.msra.mxu0 0
    %603 = vmatprep.subr.bf16.mxu0 0
    %604 = vmatpush2.bf16.msra.mxu0 0
    %605 = vmatprep.subr.bf16.mxu0 0
    %606 = vmatpush2.bf16.msra.mxu0 0
    %607 = vmatprep.subr.bf16.mxu0 0
    %608 = vmatpush2.bf16.msra.mxu0 0
    %609 = vmatprep.subr.bf16.mxu0 0
    %610 = vmatpush2.bf16.msra.mxu0 0
    %611 = vmatprep.subr.bf16.mxu0 0
    %612 = vmatpush2.bf16.msra.mxu0 0
    %613 = vmatprep.subr.bf16.mxu0 0
    %614 = vmatpush2.bf16.msra.mxu0 0
    %615 = vmatprep.subr.bf16.mxu0 0
    %616 = vmatpush2.bf16.msra.mxu0 0
    %617 = vmatprep.mubr.bf16.mxu0 0
    %618 = vmatmul.mubr.bf16.gmra.mxu0 %v520
    %v619 = vpop.f32.mrf.mxu0
    %v620 = vadd.f32 %v515, %v619
    %v621 = vpop.f32.mrf.mxu0
    %v622 = vpop.f32.mrf.mxu0
    %v623 = vpop.f32.mrf.mxu0
    %624 = vdwg.mxu0
    %v625 = vadd.f32 %v620, %v289
    %v626 = vmul.f32 %v625, 0.5
    %v627 = vtanh.pop %v626
    %v628 = vmul.f32 %v627, 0.5
    %v629 = vadd.f32 %v628, 0.5
    %v630 = vtanh.pop %v625
    %v631 = vsel %vm293, %v629, 0.0
    %632 = vrot.lane.b32.xlu0 %v629, 96
    %v633 = vpop.permute.xlu0 %632
    %634 = vrot.lane.b32.xlu0 %v630, 64
    %v635 = vpop.permute.xlu0 %634
    %636 = vrot.lane.b32.xlu0 %v629, 32
    %v637 = vpop.permute.xlu0 %636
    %v638 = vmul.f32 %v633, 0.0
    %v639 = vmul.f32 %v631, %v635
    %v640 = vadd.f32 %v638, %v639
    %v641 = vtanh.pop %v640
    %v642 = vmul.f32 %v637, %v641
    %643 = vmatprep.subr.bf16.mxu0 0
    %644 = vmatpush1.bf16.msra.mxu0 %v349
    %645 = vmatprep.subr.bf16.mxu0 0
    %646 = vmatpush1.bf16.msra.mxu0 %v348
    %647 = vmatprep.subr.bf16.mxu0 0
    %648 = vmatpush1.bf16.msra.mxu0 %v347
    %649 = vmatprep.subr.bf16.mxu0 0
    %650 = vmatpush1.bf16.msra.mxu0 %v346
    %651 = vmatprep.subr.bf16.mxu0 0
    %652 = vmatpush1.bf16.msra.mxu0 %v345
    %653 = vmatprep.subr.bf16.mxu0 0
    %654 = vmatpush1.bf16.msra.mxu0 %v344
    %655 = vmatprep.subr.bf16.mxu0 0
    %656 = vmatpush1.bf16.msra.mxu0 %v343
    %657 = vmatprep.subr.bf16.mxu0 0
    %658 = vmatpush1.bf16.msra.mxu0 %v342
    %659 = vmatprep.subr.bf16.mxu0 0
    %660 = vmatpush2.bf16.msra.mxu0 0
    %661 = vmatprep.subr.bf16.mxu0 0
    %662 = vmatpush2.bf16.msra.mxu0 0
    %663 = vmatprep.subr.bf16.mxu0 0
    %664 = vmatpush2.bf16.msra.mxu0 0
    %665 = vmatprep.subr.bf16.mxu0 0
    %666 = vmatpush2.bf16.msra.mxu0 0
    %667 = vmatprep.subr.bf16.mxu0 0
    %668 = vmatpush2.bf16.msra.mxu0 0
    %669 = vmatprep.subr.bf16.mxu0 0
    %670 = vmatpush2.bf16.msra.mxu0 0
    %671 = vmatprep.subr.bf16.mxu0 0
    %672 = vmatpush2.bf16.msra.mxu0 0
    %673 = vmatprep.subr.bf16.mxu0 0
    %674 = vmatpush2.bf16.msra.mxu0 0
    %675 = vmatprep.mubr.bf16.mxu0 0
    %676 = vmatmul.mubr.bf16.gmra.mxu0 %v520
    %v677 = vpop.f32.mrf.mxu0
    %v678 = vadd.f32 0.0, %v677
    %v679 = vpop.f32.mrf.mxu0
    %v680 = vpop.f32.mrf.mxu0
    %v681 = vpop.f32.mrf.mxu0
    %682 = vdwg.mxu0
    %v683 = vadd.f32 %v257, %v678
    %v684 = vmul.f32 %v683, 0.5
    %v685 = vtanh.pop %v684
    %v686 = vmul.f32 %v685, 0.5
    %v687 = vadd.f32 %v686, 0.5
    %v688 = vtanh.pop %v683
    %v689 = vsel %vm293, %v687, 0.0
    %690 = vrot.lane.b32.xlu0 %v687, 96
    %v691 = vpop.permute.xlu0 %690
    %692 = vrot.lane.b32.xlu0 %v688, 64
    %v693 = vpop.permute.xlu0 %692
    %694 = vrot.lane.b32.xlu0 %v687, 32
    %v695 = vpop.permute.xlu0 %694
    %v696 = vmul.f32 %v691, %v413
    %v697 = vmul.f32 %v689, %v693
    %v698 = vadd.f32 %v696, %v697
    %v699 = vtanh.pop %v698
    %v700 = vmul.f32 %v695, %v699
    %v701 = vpack.c.bf16 %v642, %v642
    %702 = vmatprep.subr.bf16.mxu0 0
    %703 = vmatpush1.bf16.msra.mxu0 %v471
    %704 = vmatprep.subr.bf16.mxu0 0
    %705 = vmatpush1.bf16.msra.mxu0 %v470
    %706 = vmatprep.subr.bf16.mxu0 0
    %707 = vmatpush1.bf16.msra.mxu0 %v469
    %708 = vmatprep.subr.bf16.mxu0 0
    %709 = vmatpush1.bf16.msra.mxu0 %v468
    %710 = vmatprep.subr.bf16.mxu0 0
    %711 = vmatpush1.bf16.msra.mxu0 %v467
    %712 = vmatprep.subr.bf16.mxu0 0
    %713 = vmatpush1.bf16.msra.mxu0 %v466
    %714 = vmatprep.subr.bf16.mxu0 0
    %715 = vmatpush1.bf16.msra.mxu0 %v465
    %716 = vmatprep.subr.bf16.mxu0 0
    %717 = vmatpush1.bf16.msra.mxu0 %v464
    %718 = vmatprep.subr.bf16.mxu0 0
    %719 = vmatpush2.bf16.msra.mxu0 0
    %720 = vmatprep.subr.bf16.mxu0 0
    %721 = vmatpush2.bf16.msra.mxu0 0
    %722 = vmatprep.subr.bf16.mxu0 0
    %723 = vmatpush2.bf16.msra.mxu0 0
    %724 = vmatprep.subr.bf16.mxu0 0
    %725 = vmatpush2.bf16.msra.mxu0 0
    %726 = vmatprep.subr.bf16.mxu0 0
    %727 = vmatpush2.bf16.msra.mxu0 0
    %728 = vmatprep.subr.bf16.mxu0 0
    %729 = vmatpush2.bf16.msra.mxu0 0
    %730 = vmatprep.subr.bf16.mxu0 0
    %731 = vmatpush2.bf16.msra.mxu0 0
    %732 = vmatprep.subr.bf16.mxu0 0
    %733 = vmatpush2.bf16.msra.mxu0 0
    %734 = vmatprep.mubr.bf16.mxu0 0
    %735 = vmatmul.mubr.bf16.gmra.mxu0 %v701
    %v736 = vpop.f32.mrf.mxu0
    %v737 = vadd.f32 0.0, %v736
    %v738 = vpop.f32.mrf.mxu0
    %v739 = vpop.f32.mrf.mxu0
    %v740 = vpop.f32.mrf.mxu0
    %741 = vdwg.mxu0
    %v742 = vpack.c.bf16 %v700, %v700
    %743 = vmatprep.subr.bf16.mxu0 0
    %744 = vmatpush1.bf16.msra.mxu0 %v576
    %745 = vmatprep.subr.bf16.mxu0 0
    %746 = vmatpush1.bf16.msra.mxu0 %v575
    %747 = vmatprep.subr.bf16.mxu0 0
    %748 = vmatpush1.bf16.msra.mxu0 %v574
    %749 = vmatprep.subr.bf16.mxu0 0
    %750 = vmatpush1.bf16.msra.mxu0 %v573
    %751 = vmatprep.subr.bf16.mxu0 0
    %752 = vmatpush1.bf16.msra.mxu0 %v572
    %753 = vmatprep.subr.bf16.mxu0 0
    %754 = vmatpush1.bf16.msra.mxu0 %v571
    %755 = vmatprep.subr.bf16.mxu0 0
    %756 = vmatpush1.bf16.msra.mxu0 %v570
    %757 = vmatprep.subr.bf16.mxu0 0
    %758 = vmatpush1.bf16.msra.mxu0 %v569
    %759 = vmatprep.subr.bf16.mxu0 0
    %760 = vmatpush2.bf16.msra.mxu0 0
    %761 = vmatprep.subr.bf16.mxu0 0
    %762 = vmatpush2.bf16.msra.mxu0 0
    %763 = vmatprep.subr.bf16.mxu0 0
    %764 = vmatpush2.bf16.msra.mxu0 0
    %765 = vmatprep.subr.bf16.mxu0 0
    %766 = vmatpush2.bf16.msra.mxu0 0
    %767 = vmatprep.subr.bf16.mxu0 0
    %768 = vmatpush2.bf16.msra.mxu0 0
    %769 = vmatprep.subr.bf16.mxu0 0
    %770 = vmatpush2.bf16.msra.mxu0 0
    %771 = vmatprep.subr.bf16.mxu0 0
    %772 = vmatpush2.bf16.msra.mxu0 0
    %773 = vmatprep.subr.bf16.mxu0 0
    %774 = vmatpush2.bf16.msra.mxu0 0
    %775 = vmatprep.mubr.bf16.mxu0 0
    %776 = vmatmul.mubr.bf16.gmra.mxu0 %v742
    %v777 = vpop.f32.mrf.mxu0
    %v778 = vadd.f32 %v737, %v777
    %v779 = vpop.f32.mrf.mxu0
    %v780 = vpop.f32.mrf.mxu0
    %v781 = vpop.f32.mrf.mxu0
    %782 = vdwg.mxu0
    %v783 = vadd.f32 %v778, %v289
    %v784 = vmul.f32 %v783, 0.5
    %v785 = vtanh.pop %v784
    %v786 = vmul.f32 %v785, 0.5
    %v787 = vadd.f32 %v786, 0.5
    %v788 = vtanh.pop %v783
    %v789 = vsel %vm293, %v787, 0.0
    %790 = vrot.lane.b32.xlu0 %v787, 96
    %v791 = vpop.permute.xlu0 %790
    %792 = vrot.lane.b32.xlu0 %v788, 64
    %v793 = vpop.permute.xlu0 %792
    %794 = vrot.lane.b32.xlu0 %v787, 32
    %v795 = vpop.permute.xlu0 %794
    %v796 = vmul.f32 %v791, %v640
    %v797 = vmul.f32 %v789, %v793
    %v798 = vadd.f32 %v796, %v797
    %v799 = vtanh.pop %v798
    %v800 = vmul.f32 %v795, %v799
    %801 = vmatprep.subr.bf16.mxu0 0
    %802 = vmatpush1.bf16.msra.mxu0 %v349
    %803 = vmatprep.subr.bf16.mxu0 0
    %804 = vmatpush1.bf16.msra.mxu0 %v348
    %805 = vmatprep.subr.bf16.mxu0 0
    %806 = vmatpush1.bf16.msra.mxu0 %v347
    %807 = vmatprep.subr.bf16.mxu0 0
    %808 = vmatpush1.bf16.msra.mxu0 %v346
    %809 = vmatprep.subr.bf16.mxu0 0
    %810 = vmatpush1.bf16.msra.mxu0 %v345
    %811 = vmatprep.subr.bf16.mxu0 0
    %812 = vmatpush1.bf16.msra.mxu0 %v344
    %813 = vmatprep.subr.bf16.mxu0 0
    %814 = vmatpush1.bf16.msra.mxu0 %v343
    %815 = vmatprep.subr.bf16.mxu0 0
    %816 = vmatpush1.bf16.msra.mxu0 %v342
    %817 = vmatprep.subr.bf16.mxu0 0
    %818 = vmatpush2.bf16.msra.mxu0 0
    %819 = vmatprep.subr.bf16.mxu0 0
    %820 = vmatpush2.bf16.msra.mxu0 0
    %821 = vmatprep.subr.bf16.mxu0 0
    %822 = vmatpush2.bf16.msra.mxu0 0
    %823 = vmatprep.subr.bf16.mxu0 0
    %824 = vmatpush2.bf16.msra.mxu0 0
    %825 = vmatprep.subr.bf16.mxu0 0
    %826 = vmatpush2.bf16.msra.mxu0 0
    %827 = vmatprep.subr.bf16.mxu0 0
    %828 = vmatpush2.bf16.msra.mxu0 0
    %829 = vmatprep.subr.bf16.mxu0 0
    %830 = vmatpush2.bf16.msra.mxu0 0
    %831 = vmatprep.subr.bf16.mxu0 0
    %832 = vmatpush2.bf16.msra.mxu0 0
    %833 = vmatprep.mubr.bf16.mxu0 0
    %834 = vmatmul.mubr.bf16.gmra.mxu0 %v742
    %v835 = vpop.f32.mrf.mxu0
    %v836 = vadd.f32 0.0, %v835
    %v837 = vpop.f32.mrf.mxu0
    %v838 = vpop.f32.mrf.mxu0
    %v839 = vpop.f32.mrf.mxu0
    %840 = vdwg.mxu0
    %v841 = vadd.f32 %v262, %v836
    %v842 = vmul.f32 %v841, 0.5
    %v843 = vtanh.pop %v842
    %v844 = vmul.f32 %v843, 0.5
    %v845 = vadd.f32 %v844, 0.5
    %v846 = vtanh.pop %v841
    %v847 = vsel %vm293, %v845, 0.0
    %848 = vrot.lane.b32.xlu0 %v845, 96
    %v849 = vpop.permute.xlu0 %848
    %850 = vrot.lane.b32.xlu0 %v846, 64
    %v851 = vpop.permute.xlu0 %850
    %852 = vrot.lane.b32.xlu0 %v845, 32
    %v853 = vpop.permute.xlu0 %852
    %v854 = vmul.f32 %v849, %v698
    %v855 = vmul.f32 %v847, %v851
    %v856 = vadd.f32 %v854, %v855
    %v857 = vtanh.pop %v856
    %v858 = vmul.f32 %v853, %v857
    %v859 = vpack.c.bf16 %v800, %v800
    %860 = vmatprep.subr.bf16.mxu0 0
    %861 = vmatpush1.bf16.msra.mxu0 %v471
    %862 = vmatprep.subr.bf16.mxu0 0
    %863 = vmatpush1.bf16.msra.mxu0 %v470
    %864 = vmatprep.subr.bf16.mxu0 0
    %865 = vmatpush1.bf16.msra.mxu0 %v469
    %866 = vmatprep.subr.bf16.mxu0 0
    %867 = vmatpush1.bf16.msra.mxu0 %v468
    %868 = vmatprep.subr.bf16.mxu0 0
    %869 = vmatpush1.bf16.msra.mxu0 %v467
    %870 = vmatprep.subr.bf16.mxu0 0
    %871 = vmatpush1.bf16.msra.mxu0 %v466
    %872 = vmatprep.subr.bf16.mxu0 0
    %873 = vmatpush1.bf16.msra.mxu0 %v465
    %874 = vmatprep.subr.bf16.mxu0 0
    %875 = vmatpush1.bf16.msra.mxu0 %v464
    %876 = vmatprep.subr.bf16.mxu0 0
    %877 = vmatpush2.bf16.msra.mxu0 0
    %878 = vmatprep.subr.bf16.mxu0 0
    %879 = vmatpush2.bf16.msra.mxu0 0
    %880 = vmatprep.subr.bf16.mxu0 0
    %881 = vmatpush2.bf16.msra.mxu0 0
    %882 = vmatprep.subr.bf16.mxu0 0
    %883 = vmatpush2.bf16.msra.mxu0 0
    %884 = vmatprep.subr.bf16.mxu0 0
    %885 = vmatpush2.bf16.msra.mxu0 0
    %886 = vmatprep.subr.bf16.mxu0 0
    %887 = vmatpush2.bf16.msra.mxu0 0
    %888 = vmatprep.subr.bf16.mxu0 0
    %889 = vmatpush2.bf16.msra.mxu0 0
    %890 = vmatprep.subr.bf16.mxu0 0
    %891 = vmatpush2.bf16.msra.mxu0 0
    %892 = vmatprep.mubr.bf16.mxu0 0
    %893 = vmatmul.mubr.bf16.gmra.mxu0 %v859
    %v894 = vpop.f32.mrf.mxu0
    %v895 = vadd.f32 0.0, %v894
    %v896 = vpop.f32.mrf.mxu0
    %v897 = vpop.f32.mrf.mxu0
    %v898 = vpop.f32.mrf.mxu0
    %899 = vdwg.mxu0
    %v900 = vpack.c.bf16 %v858, %v858
    %901 = vmatprep.subr.bf16.mxu0 0
    %902 = vmatpush1.bf16.msra.mxu0 %v576
    %903 = vmatprep.subr.bf16.mxu0 0
    %904 = vmatpush1.bf16.msra.mxu0 %v575
    %905 = vmatprep.subr.bf16.mxu0 0
    %906 = vmatpush1.bf16.msra.mxu0 %v574
    %907 = vmatprep.subr.bf16.mxu0 0
    %908 = vmatpush1.bf16.msra.mxu0 %v573
    %909 = vmatprep.subr.bf16.mxu0 0
    %910 = vmatpush1.bf16.msra.mxu0 %v572
    %911 = vmatprep.subr.bf16.mxu0 0
    %912 = vmatpush1.bf16.msra.mxu0 %v571
    %913 = vmatprep.subr.bf16.mxu0 0
    %914 = vmatpush1.bf16.msra.mxu0 %v570
    %915 = vmatprep.subr.bf16.mxu0 0
    %916 = vmatpush1.bf16.msra.mxu0 %v569
    %917 = vmatprep.subr.bf16.mxu0 0
    %918 = vmatpush2.bf16.msra.mxu0 0
    %919 = vmatprep.subr.bf16.mxu0 0
    %920 = vmatpush2.bf16.msra.mxu0 0
    %921 = vmatprep.subr.bf16.mxu0 0
    %922 = vmatpush2.bf16.msra.mxu0 0
    %923 = vmatprep.subr.bf16.mxu0 0
    %924 = vmatpush2.bf16.msra.mxu0 0
    %925 = vmatprep.subr.bf16.mxu0 0
    %926 = vmatpush2.bf16.msra.mxu0 0
    %927 = vmatprep.subr.bf16.mxu0 0
    %928 = vmatpush2.bf16.msra.mxu0 0
    %929 = vmatprep.subr.bf16.mxu0 0
    %930 = vmatpush2.bf16.msra.mxu0 0
    %931 = vmatprep.subr.bf16.mxu0 0
    %932 = vmatpush2.bf16.msra.mxu0 0
    %933 = vmatprep.mubr.bf16.mxu0 0
    %934 = vmatmul.mubr.bf16.gmra.mxu0 %v900
    %v935 = vpop.f32.mrf.mxu0
    %v936 = vadd.f32 %v895, %v935
    %v937 = vpop.f32.mrf.mxu0
    %v938 = vpop.f32.mrf.mxu0
    %v939 = vpop.f32.mrf.mxu0
    %940 = vdwg.mxu0
    %v941 = vadd.f32 %v936, %v289
    %v942 = vmul.f32 %v941, 0.5
    %v943 = vtanh.pop %v942
    %v944 = vmul.f32 %v943, 0.5
    %v945 = vadd.f32 %v944, 0.5
    %v946 = vtanh.pop %v941
    %v947 = vsel %vm293, %v945, 0.0
    %948 = vrot.lane.b32.xlu0 %v945, 96
    %v949 = vpop.permute.xlu0 %948
    %950 = vrot.lane.b32.xlu0 %v946, 64
    %v951 = vpop.permute.xlu0 %950
    %952 = vrot.lane.b32.xlu0 %v945, 32
    %v953 = vpop.permute.xlu0 %952
    %v954 = vmul.f32 %v949, %v798
    %v955 = vmul.f32 %v947, %v951
    %v956 = vadd.f32 %v954, %v955
    %v957 = vtanh.pop %v956
    %v958 = vmul.f32 %v953, %v957
    %959 = vmatprep.subr.bf16.mxu0 0
    %960 = vmatpush1.bf16.msra.mxu0 %v349
    %961 = vmatprep.subr.bf16.mxu0 0
    %962 = vmatpush1.bf16.msra.mxu0 %v348
    %963 = vmatprep.subr.bf16.mxu0 0
    %964 = vmatpush1.bf16.msra.mxu0 %v347
    %965 = vmatprep.subr.bf16.mxu0 0
    %966 = vmatpush1.bf16.msra.mxu0 %v346
    %967 = vmatprep.subr.bf16.mxu0 0
    %968 = vmatpush1.bf16.msra.mxu0 %v345
    %969 = vmatprep.subr.bf16.mxu0 0
    %970 = vmatpush1.bf16.msra.mxu0 %v344
    %971 = vmatprep.subr.bf16.mxu0 0
    %972 = vmatpush1.bf16.msra.mxu0 %v343
    %973 = vmatprep.subr.bf16.mxu0 0
    %974 = vmatpush1.bf16.msra.mxu0 %v342
    %975 = vmatprep.subr.bf16.mxu0 0
    %976 = vmatpush2.bf16.msra.mxu0 0
    %977 = vmatprep.subr.bf16.mxu0 0
    %978 = vmatpush2.bf16.msra.mxu0 0
    %979 = vmatprep.subr.bf16.mxu0 0
    %980 = vmatpush2.bf16.msra.mxu0 0
    %981 = vmatprep.subr.bf16.mxu0 0
    %982 = vmatpush2.bf16.msra.mxu0 0
    %983 = vmatprep.subr.bf16.mxu0 0
    %984 = vmatpush2.bf16.msra.mxu0 0
    %985 = vmatprep.subr.bf16.mxu0 0
    %986 = vmatpush2.bf16.msra.mxu0 0
    %987 = vmatprep.subr.bf16.mxu0 0
    %988 = vmatpush2.bf16.msra.mxu0 0
    %989 = vmatprep.subr.bf16.mxu0 0
    %990 = vmatpush2.bf16.msra.mxu0 0
    %991 = vmatprep.mubr.bf16.mxu0 0
    %992 = vmatmul.mubr.bf16.gmra.mxu0 %v900
    %v993 = vpop.f32.mrf.mxu0
    %v994 = vadd.f32 0.0, %v993
    %v995 = vpop.f32.mrf.mxu0
    %v996 = vpop.f32.mrf.mxu0
    %v997 = vpop.f32.mrf.mxu0
    %998 = vdwg.mxu0
    %v999 = vadd.f32 %v265, %v994
    %v1000 = vmul.f32 %v999, 0.5
    %v1001 = vtanh.pop %v1000
    %v1002 = vmul.f32 %v1001, 0.5
    %v1003 = vadd.f32 %v1002, 0.5
    %v1004 = vtanh.pop %v999
    %v1005 = vsel %vm293, %v1003, 0.0
    %1006 = vrot.lane.b32.xlu0 %v1003, 96
    %v1007 = vpop.permute.xlu0 %1006
    %1008 = vrot.lane.b32.xlu0 %v1004, 64
    %v1009 = vpop.permute.xlu0 %1008
    %1010 = vrot.lane.b32.xlu0 %v1003, 32
    %v1011 = vpop.permute.xlu0 %1010
    %v1012 = vmul.f32 %v1007, %v856
    %v1013 = vmul.f32 %v1005, %v1009
    %v1014 = vadd.f32 %v1012, %v1013
    %v1015 = vtanh.pop %v1014
    %v1016 = vmul.f32 %v1011, %v1015
    %v1017 = vpack.c.bf16 %v958, %v958
    %1018 = vmatprep.subr.bf16.mxu0 0
    %1019 = vmatpush1.bf16.msra.mxu0 %v471
    %1020 = vmatprep.subr.bf16.mxu0 0
    %1021 = vmatpush1.bf16.msra.mxu0 %v470
    %1022 = vmatprep.subr.bf16.mxu0 0
    %1023 = vmatpush1.bf16.msra.mxu0 %v469
    %1024 = vmatprep.subr.bf16.mxu0 0
    %1025 = vmatpush1.bf16.msra.mxu0 %v468
    %1026 = vmatprep.subr.bf16.mxu0 0
    %1027 = vmatpush1.bf16.msra.mxu0 %v467
    %1028 = vmatprep.subr.bf16.mxu0 0
    %1029 = vmatpush1.bf16.msra.mxu0 %v466
    %1030 = vmatprep.subr.bf16.mxu0 0
    %1031 = vmatpush1.bf16.msra.mxu0 %v465
    %1032 = vmatprep.subr.bf16.mxu0 0
    %1033 = vmatpush1.bf16.msra.mxu0 %v464
    %1034 = vmatprep.subr.bf16.mxu0 0
    %1035 = vmatpush2.bf16.msra.mxu0 0
    %1036 = vmatprep.subr.bf16.mxu0 0
    %1037 = vmatpush2.bf16.msra.mxu0 0
    %1038 = vmatprep.subr.bf16.mxu0 0
    %1039 = vmatpush2.bf16.msra.mxu0 0
    %1040 = vmatprep.subr.bf16.mxu0 0
    %1041 = vmatpush2.bf16.msra.mxu0 0
    %1042 = vmatprep.subr.bf16.mxu0 0
    %1043 = vmatpush2.bf16.msra.mxu0 0
    %1044 = vmatprep.subr.bf16.mxu0 0
    %1045 = vmatpush2.bf16.msra.mxu0 0
    %1046 = vmatprep.subr.bf16.mxu0 0
    %1047 = vmatpush2.bf16.msra.mxu0 0
    %1048 = vmatprep.subr.bf16.mxu0 0
    %1049 = vmatpush2.bf16.msra.mxu0 0
    %1050 = vmatprep.mubr.bf16.mxu0 0
    %1051 = vmatmul.mubr.bf16.gmra.mxu0 %v1017
    %v1052 = vpop.f32.mrf.mxu0
    %v1053 = vadd.f32 0.0, %v1052
    %v1054 = vpop.f32.mrf.mxu0
    %v1055 = vpop.f32.mrf.mxu0
    %v1056 = vpop.f32.mrf.mxu0
    %1057 = vdwg.mxu0
    %v1058 = vpack.c.bf16 %v1016, %v1016
    %1059 = vmatprep.subr.bf16.mxu0 0
    %1060 = vmatpush1.bf16.msra.mxu0 %v576
    %1061 = vmatprep.subr.bf16.mxu0 0
    %1062 = vmatpush1.bf16.msra.mxu0 %v575
    %1063 = vmatprep.subr.bf16.mxu0 0
    %1064 = vmatpush1.bf16.msra.mxu0 %v574
    %1065 = vmatprep.subr.bf16.mxu0 0
    %1066 = vmatpush1.bf16.msra.mxu0 %v573
    %1067 = vmatprep.subr.bf16.mxu0 0
    %1068 = vmatpush1.bf16.msra.mxu0 %v572
    %1069 = vmatprep.subr.bf16.mxu0 0
    %1070 = vmatpush1.bf16.msra.mxu0 %v571
    %1071 = vmatprep.subr.bf16.mxu0 0
    %1072 = vmatpush1.bf16.msra.mxu0 %v570
    %1073 = vmatprep.subr.bf16.mxu0 0
    %1074 = vmatpush1.bf16.msra.mxu0 %v569
    %1075 = vmatprep.subr.bf16.mxu0 0
    %1076 = vmatpush2.bf16.msra.mxu0 0
    %1077 = vmatprep.subr.bf16.mxu0 0
    %1078 = vmatpush2.bf16.msra.mxu0 0
    %1079 = vmatprep.subr.bf16.mxu0 0
    %1080 = vmatpush2.bf16.msra.mxu0 0
    %1081 = vmatprep.subr.bf16.mxu0 0
    %1082 = vmatpush2.bf16.msra.mxu0 0
    %1083 = vmatprep.subr.bf16.mxu0 0
    %1084 = vmatpush2.bf16.msra.mxu0 0
    %1085 = vmatprep.subr.bf16.mxu0 0
    %1086 = vmatpush2.bf16.msra.mxu0 0
    %1087 = vmatprep.subr.bf16.mxu0 0
    %1088 = vmatpush2.bf16.msra.mxu0 0
    %1089 = vmatprep.subr.bf16.mxu0 0
    %1090 = vmatpush2.bf16.msra.mxu0 0
    %1091 = vmatprep.mubr.bf16.mxu0 0
    %1092 = vmatmul.mubr.bf16.gmra.mxu0 %v1058
    %v1093 = vpop.f32.mrf.mxu0
    %v1094 = vadd.f32 %v1053, %v1093
    %v1095 = vpop.f32.mrf.mxu0
    %v1096 = vpop.f32.mrf.mxu0
    %v1097 = vpop.f32.mrf.mxu0
    %1098 = vdwg.mxu0
    %v1099 = vadd.f32 %v1094, %v289
    %v1100 = vmul.f32 %v1099, 0.5
    %v1101 = vtanh.pop %v1100
    %v1102 = vmul.f32 %v1101, 0.5
    %v1103 = vadd.f32 %v1102, 0.5
    %v1104 = vtanh.pop %v1099
    %v1105 = vsel %vm293, %v1103, 0.0
    %1106 = vrot.lane.b32.xlu0 %v1103, 96
    %v1107 = vpop.permute.xlu0 %1106
    %1108 = vrot.lane.b32.xlu0 %v1104, 64
    %v1109 = vpop.permute.xlu0 %1108
    %1110 = vrot.lane.b32.xlu0 %v1103, 32
    %v1111 = vpop.permute.xlu0 %1110
    %v1112 = vmul.f32 %v1107, %v956
    %v1113 = vmul.f32 %v1105, %v1109
    %v1114 = vadd.f32 %v1112, %v1113
    %v1115 = vtanh.pop %v1114
    %v1116 = vmul.f32 %v1111, %v1115
    %1117 = vmatprep.subr.bf16.mxu0 0
    %1118 = vmatpush1.bf16.msra.mxu0 %v349
    %1119 = vmatprep.subr.bf16.mxu0 0
    %1120 = vmatpush1.bf16.msra.mxu0 %v348
    %1121 = vmatprep.subr.bf16.mxu0 0
    %1122 = vmatpush1.bf16.msra.mxu0 %v347
    %1123 = vmatprep.subr.bf16.mxu0 0
    %1124 = vmatpush1.bf16.msra.mxu0 %v346
    %1125 = vmatprep.subr.bf16.mxu0 0
    %1126 = vmatpush1.bf16.msra.mxu0 %v345
    %1127 = vmatprep.subr.bf16.mxu0 0
    %1128 = vmatpush1.bf16.msra.mxu0 %v344
    %1129 = vmatprep.subr.bf16.mxu0 0
    %1130 = vmatpush1.bf16.msra.mxu0 %v343
    %1131 = vmatprep.subr.bf16.mxu0 0
    %1132 = vmatpush1.bf16.msra.mxu0 %v342
    %1133 = vmatprep.subr.bf16.mxu0 0
    %1134 = vmatpush2.bf16.msra.mxu0 0
    %1135 = vmatprep.subr.bf16.mxu0 0
    %1136 = vmatpush2.bf16.msra.mxu0 0
    %1137 = vmatprep.subr.bf16.mxu0 0
    %1138 = vmatpush2.bf16.msra.mxu0 0
    %1139 = vmatprep.subr.bf16.mxu0 0
    %1140 = vmatpush2.bf16.msra.mxu0 0
    %1141 = vmatprep.subr.bf16.mxu0 0
    %1142 = vmatpush2.bf16.msra.mxu0 0
    %1143 = vmatprep.subr.bf16.mxu0 0
    %1144 = vmatpush2.bf16.msra.mxu0 0
    %1145 = vmatprep.subr.bf16.mxu0 0
    %1146 = vmatpush2.bf16.msra.mxu0 0
    %1147 = vmatprep.subr.bf16.mxu0 0
    %1148 = vmatpush2.bf16.msra.mxu0 0
    %1149 = vmatprep.mubr.bf16.mxu0 0
    %1150 = vmatmul.mubr.bf16.gmra.mxu0 %v1058
    %v1151 = vpop.f32.mrf.mxu0
    %v1152 = vadd.f32 0.0, %v1151
    %v1153 = vpop.f32.mrf.mxu0
    %v1154 = vpop.f32.mrf.mxu0
    %v1155 = vpop.f32.mrf.mxu0
    %1156 = vdwg.mxu0
    %v1157 = vadd.f32 %v270, %v1152
    %v1158 = vmul.f32 %v1157, 0.5
    %v1159 = vtanh.pop %v1158
    %v1160 = vmul.f32 %v1159, 0.5
    %v1161 = vadd.f32 %v1160, 0.5
    %v1162 = vtanh.pop %v1157
    %v1163 = vsel %vm293, %v1161, 0.0
    %1164 = vrot.lane.b32.xlu0 %v1161, 96
    %v1165 = vpop.permute.xlu0 %1164
    %1166 = vrot.lane.b32.xlu0 %v1162, 64
    %v1167 = vpop.permute.xlu0 %1166
    %1168 = vrot.lane.b32.xlu0 %v1161, 32
    %v1169 = vpop.permute.xlu0 %1168
    %v1170 = vmul.f32 %v1165, %v1014
    %v1171 = vmul.f32 %v1163, %v1167
    %v1172 = vadd.f32 %v1170, %v1171
    %v1173 = vtanh.pop %v1172
    %v1174 = vmul.f32 %v1169, %v1173
    %v1175 = vpack.c.bf16 %v1116, %v1116
    %1176 = vmatprep.subr.bf16.mxu0 0
    %1177 = vmatpush1.bf16.msra.mxu0 %v471
    %1178 = vmatprep.subr.bf16.mxu0 0
    %1179 = vmatpush1.bf16.msra.mxu0 %v470
    %1180 = vmatprep.subr.bf16.mxu0 0
    %1181 = vmatpush1.bf16.msra.mxu0 %v469
    %1182 = vmatprep.subr.bf16.mxu0 0
    %1183 = vmatpush1.bf16.msra.mxu0 %v468
    %1184 = vmatprep.subr.bf16.mxu0 0
    %1185 = vmatpush1.bf16.msra.mxu0 %v467
    %1186 = vmatprep.subr.bf16.mxu0 0
    %1187 = vmatpush1.bf16.msra.mxu0 %v466
    %1188 = vmatprep.subr.bf16.mxu0 0
    %1189 = vmatpush1.bf16.msra.mxu0 %v465
    %1190 = vmatprep.subr.bf16.mxu0 0
    %1191 = vmatpush1.bf16.msra.mxu0 %v464
    %1192 = vmatprep.subr.bf16.mxu0 0
    %1193 = vmatpush2.bf16.msra.mxu0 0
    %1194 = vmatprep.subr.bf16.mxu0 0
    %1195 = vmatpush2.bf16.msra.mxu0 0
    %1196 = vmatprep.subr.bf16.mxu0 0
    %1197 = vmatpush2.bf16.msra.mxu0 0
    %1198 = vmatprep.subr.bf16.mxu0 0
    %1199 = vmatpush2.bf16.msra.mxu0 0
    %1200 = vmatprep.subr.bf16.mxu0 0
    %1201 = vmatpush2.bf16.msra.mxu0 0
    %1202 = vmatprep.subr.bf16.mxu0 0
    %1203 = vmatpush2.bf16.msra.mxu0 0
    %1204 = vmatprep.subr.bf16.mxu0 0
    %1205 = vmatpush2.bf16.msra.mxu0 0
    %1206 = vmatprep.subr.bf16.mxu0 0
    %1207 = vmatpush2.bf16.msra.mxu0 0
    %1208 = vmatprep.mubr.bf16.mxu0 0
    %1209 = vmatmul.mubr.bf16.gmra.mxu0 %v1175
    %v1210 = vpop.f32.mrf.mxu0
    %v1211 = vadd.f32 0.0, %v1210
    %v1212 = vpop.f32.mrf.mxu0
    %v1213 = vpop.f32.mrf.mxu0
    %v1214 = vpop.f32.mrf.mxu0
    %1215 = vdwg.mxu0
    %v1216 = vpack.c.bf16 %v1174, %v1174
    %1217 = vmatprep.subr.bf16.mxu0 0
    %1218 = vmatpush1.bf16.msra.mxu0 %v576
    %1219 = vmatprep.subr.bf16.mxu0 0
    %1220 = vmatpush1.bf16.msra.mxu0 %v575
    %1221 = vmatprep.subr.bf16.mxu0 0
    %1222 = vmatpush1.bf16.msra.mxu0 %v574
    %1223 = vmatprep.subr.bf16.mxu0 0
    %1224 = vmatpush1.bf16.msra.mxu0 %v573
    %1225 = vmatprep.subr.bf16.mxu0 0
    %1226 = vmatpush1.bf16.msra.mxu0 %v572
    %1227 = vmatprep.subr.bf16.mxu0 0
    %1228 = vmatpush1.bf16.msra.mxu0 %v571
    %1229 = vmatprep.subr.bf16.mxu0 0
    %1230 = vmatpush1.bf16.msra.mxu0 %v570
    %1231 = vmatprep.subr.bf16.mxu0 0
    %1232 = vmatpush1.bf16.msra.mxu0 %v569
    %1233 = vmatprep.subr.bf16.mxu0 0
    %1234 = vmatpush2.bf16.msra.mxu0 0
    %1235 = vmatprep.subr.bf16.mxu0 0
    %1236 = vmatpush2.bf16.msra.mxu0 0
    %1237 = vmatprep.subr.bf16.mxu0 0
    %1238 = vmatpush2.bf16.msra.mxu0 0
    %1239 = vmatprep.subr.bf16.mxu0 0
    %1240 = vmatpush2.bf16.msra.mxu0 0
    %1241 = vmatprep.subr.bf16.mxu0 0
    %1242 = vmatpush2.bf16.msra.mxu0 0
    %1243 = vmatprep.subr.bf16.mxu0 0
    %1244 = vmatpush2.bf16.msra.mxu0 0
    %1245 = vmatprep.subr.bf16.mxu0 0
    %1246 = vmatpush2.bf16.msra.mxu0 0
    %1247 = vmatprep.subr.bf16.mxu0 0
    %1248 = vmatpush2.bf16.msra.mxu0 0
    %1249 = vmatprep.mubr.bf16.mxu0 0
    %1250 = vmatmul.mubr.bf16.gmra.mxu0 %v1216
    %v1251 = vpop.f32.mrf.mxu0
    %v1252 = vadd.f32 %v1211, %v1251
    %v1253 = vpop.f32.mrf.mxu0
    %v1254 = vpop.f32.mrf.mxu0
    %v1255 = vpop.f32.mrf.mxu0
    %1256 = vdwg.mxu0
    %v1257 = vadd.f32 %v1252, %v289
    %v1258 = vmul.f32 %v1257, 0.5
    %v1259 = vtanh.pop %v1258
    %v1260 = vmul.f32 %v1259, 0.5
    %v1261 = vadd.f32 %v1260, 0.5
    %v1262 = vtanh.pop %v1257
    %v1263 = vsel %vm293, %v1261, 0.0
    %1264 = vrot.lane.b32.xlu0 %v1261, 96
    %v1265 = vpop.permute.xlu0 %1264
    %1266 = vrot.lane.b32.xlu0 %v1262, 64
    %v1267 = vpop.permute.xlu0 %1266
    %1268 = vrot.lane.b32.xlu0 %v1261, 32
    %v1269 = vpop.permute.xlu0 %1268
    %v1270 = vmul.f32 %v1265, %v1114
    %v1271 = vmul.f32 %v1263, %v1267
    %v1272 = vadd.f32 %v1270, %v1271
    %v1273 = vtanh.pop %v1272
    %v1274 = vmul.f32 %v1269, %v1273
    %1275 = vmatprep.subr.bf16.mxu0 0
    %1276 = vmatpush1.bf16.msra.mxu0 %v349
    %1277 = vmatprep.subr.bf16.mxu0 0
    %1278 = vmatpush1.bf16.msra.mxu0 %v348
    %1279 = vmatprep.subr.bf16.mxu0 0
    %1280 = vmatpush1.bf16.msra.mxu0 %v347
    %1281 = vmatprep.subr.bf16.mxu0 0
    %1282 = vmatpush1.bf16.msra.mxu0 %v346
    %1283 = vmatprep.subr.bf16.mxu0 0
    %1284 = vmatpush1.bf16.msra.mxu0 %v345
    %1285 = vmatprep.subr.bf16.mxu0 0
    %1286 = vmatpush1.bf16.msra.mxu0 %v344
    %1287 = vmatprep.subr.bf16.mxu0 0
    %1288 = vmatpush1.bf16.msra.mxu0 %v343
    %1289 = vmatprep.subr.bf16.mxu0 0
    %1290 = vmatpush1.bf16.msra.mxu0 %v342
    %1291 = vmatprep.subr.bf16.mxu0 0
    %1292 = vmatpush2.bf16.msra.mxu0 0
    %1293 = vmatprep.subr.bf16.mxu0 0
    %1294 = vmatpush2.bf16.msra.mxu0 0
    %1295 = vmatprep.subr.bf16.mxu0 0
    %1296 = vmatpush2.bf16.msra.mxu0 0
    %1297 = vmatprep.subr.bf16.mxu0 0
    %1298 = vmatpush2.bf16.msra.mxu0 0
    %1299 = vmatprep.subr.bf16.mxu0 0
    %1300 = vmatpush2.bf16.msra.mxu0 0
    %1301 = vmatprep.subr.bf16.mxu0 0
    %1302 = vmatpush2.bf16.msra.mxu0 0
    %1303 = vmatprep.subr.bf16.mxu0 0
    %1304 = vmatpush2.bf16.msra.mxu0 0
    %1305 = vmatprep.subr.bf16.mxu0 0
    %1306 = vmatpush2.bf16.msra.mxu0 0
    %1307 = vmatprep.mubr.bf16.mxu0 0
    %1308 = vmatmul.mubr.bf16.gmra.mxu0 %v1216
    %v1309 = vpop.f32.mrf.mxu0
    %v1310 = vadd.f32 0.0, %v1309
    %v1311 = vpop.f32.mrf.mxu0
    %v1312 = vpop.f32.mrf.mxu0
    %v1313 = vpop.f32.mrf.mxu0
    %1314 = vdwg.mxu0
    %v1315 = vadd.f32 %v273, %v1310
    %v1316 = vmul.f32 %v1315, 0.5
    %v1317 = vtanh.pop %v1316
    %v1318 = vmul.f32 %v1317, 0.5
    %v1319 = vadd.f32 %v1318, 0.5
    %v1320 = vtanh.pop %v1315
    %v1321 = vsel %vm293, %v1319, 0.0
    %1322 = vrot.lane.b32.xlu0 %v1319, 96
    %v1323 = vpop.permute.xlu0 %1322
    %1324 = vrot.lane.b32.xlu0 %v1320, 64
    %v1325 = vpop.permute.xlu0 %1324
    %1326 = vrot.lane.b32.xlu0 %v1319, 32
    %v1327 = vpop.permute.xlu0 %1326
    %v1328 = vmul.f32 %v1323, %v1172
    %v1329 = vmul.f32 %v1321, %v1325
    %v1330 = vadd.f32 %v1328, %v1329
    %v1331 = vtanh.pop %v1330
    %v1332 = vmul.f32 %v1327, %v1331
    %v1333 = vpack.c.bf16 %v1274, %v1274
    %1334 = vmatprep.subr.bf16.mxu0 0
    %1335 = vmatpush1.bf16.msra.mxu0 %v471
    %1336 = vmatprep.subr.bf16.mxu0 0
    %1337 = vmatpush1.bf16.msra.mxu0 %v470
    %1338 = vmatprep.subr.bf16.mxu0 0
    %1339 = vmatpush1.bf16.msra.mxu0 %v469
    %1340 = vmatprep.subr.bf16.mxu0 0
    %1341 = vmatpush1.bf16.msra.mxu0 %v468
    %1342 = vmatprep.subr.bf16.mxu0 0
    %1343 = vmatpush1.bf16.msra.mxu0 %v467
    %1344 = vmatprep.subr.bf16.mxu0 0
    %1345 = vmatpush1.bf16.msra.mxu0 %v466
    %1346 = vmatprep.subr.bf16.mxu0 0
    %1347 = vmatpush1.bf16.msra.mxu0 %v465
    %1348 = vmatprep.subr.bf16.mxu0 0
    %1349 = vmatpush1.bf16.msra.mxu0 %v464
    %1350 = vmatprep.subr.bf16.mxu0 0
    %1351 = vmatpush2.bf16.msra.mxu0 0
    %1352 = vmatprep.subr.bf16.mxu0 0
    %1353 = vmatpush2.bf16.msra.mxu0 0
    %1354 = vmatprep.subr.bf16.mxu0 0
    %1355 = vmatpush2.bf16.msra.mxu0 0
    %1356 = vmatprep.subr.bf16.mxu0 0
    %1357 = vmatpush2.bf16.msra.mxu0 0
    %1358 = vmatprep.subr.bf16.mxu0 0
    %1359 = vmatpush2.bf16.msra.mxu0 0
    %1360 = vmatprep.subr.bf16.mxu0 0
    %1361 = vmatpush2.bf16.msra.mxu0 0
    %1362 = vmatprep.subr.bf16.mxu0 0
    %1363 = vmatpush2.bf16.msra.mxu0 0
    %1364 = vmatprep.subr.bf16.mxu0 0
    %1365 = vmatpush2.bf16.msra.mxu0 0
    %1366 = vmatprep.mubr.bf16.mxu0 0
    %1367 = vmatmul.mubr.bf16.gmra.mxu0 %v1333
    %v1368 = vpop.f32.mrf.mxu0
    %v1369 = vadd.f32 0.0, %v1368
    %v1370 = vpop.f32.mrf.mxu0
    %v1371 = vpop.f32.mrf.mxu0
    %v1372 = vpop.f32.mrf.mxu0
    %1373 = vdwg.mxu0
    %v1374 = vpack.c.bf16 %v1332, %v1332
    %1375 = vmatprep.subr.bf16.mxu0 0
    %1376 = vmatpush1.bf16.msra.mxu0 %v576
    %1377 = vmatprep.subr.bf16.mxu0 0
    %1378 = vmatpush1.bf16.msra.mxu0 %v575
    %1379 = vmatprep.subr.bf16.mxu0 0
    %1380 = vmatpush1.bf16.msra.mxu0 %v574
    %1381 = vmatprep.subr.bf16.mxu0 0
    %1382 = vmatpush1.bf16.msra.mxu0 %v573
    %1383 = vmatprep.subr.bf16.mxu0 0
    %1384 = vmatpush1.bf16.msra.mxu0 %v572
    %1385 = vmatprep.subr.bf16.mxu0 0
    %1386 = vmatpush1.bf16.msra.mxu0 %v571
    %1387 = vmatprep.subr.bf16.mxu0 0
    %1388 = vmatpush1.bf16.msra.mxu0 %v570
    %1389 = vmatprep.subr.bf16.mxu0 0
    %1390 = vmatpush1.bf16.msra.mxu0 %v569
    %1391 = vmatprep.subr.bf16.mxu0 0
    %1392 = vmatpush2.bf16.msra.mxu0 0
    %1393 = vmatprep.subr.bf16.mxu0 0
    %1394 = vmatpush2.bf16.msra.mxu0 0
    %1395 = vmatprep.subr.bf16.mxu0 0
    %1396 = vmatpush2.bf16.msra.mxu0 0
    %1397 = vmatprep.subr.bf16.mxu0 0
    %1398 = vmatpush2.bf16.msra.mxu0 0
    %1399 = vmatprep.subr.bf16.mxu0 0
    %1400 = vmatpush2.bf16.msra.mxu0 0
    %1401 = vmatprep.subr.bf16.mxu0 0
    %1402 = vmatpush2.bf16.msra.mxu0 0
    %1403 = vmatprep.subr.bf16.mxu0 0
    %1404 = vmatpush2.bf16.msra.mxu0 0
    %1405 = vmatprep.subr.bf16.mxu0 0
    %1406 = vmatpush2.bf16.msra.mxu0 0
    %1407 = vmatprep.mubr.bf16.mxu0 0
    %1408 = vmatmul.mubr.bf16.gmra.mxu0 %v1374
    %v1409 = vpop.f32.mrf.mxu0
    %v1410 = vadd.f32 %v1369, %v1409
    %v1411 = vpop.f32.mrf.mxu0
    %v1412 = vpop.f32.mrf.mxu0
    %v1413 = vpop.f32.mrf.mxu0
    %1414 = vdwg.mxu0
    %v1415 = vadd.f32 %v1410, %v289
    %v1416 = vmul.f32 %v1415, 0.5
    %v1417 = vtanh.pop %v1416
    %v1418 = vmul.f32 %v1417, 0.5
    %v1419 = vadd.f32 %v1418, 0.5
    %v1420 = vtanh.pop %v1415
    %v1421 = vsel %vm293, %v1419, 0.0
    %1422 = vrot.lane.b32.xlu0 %v1419, 96
    %v1423 = vpop.permute.xlu0 %1422
    %1424 = vrot.lane.b32.xlu0 %v1420, 64
    %v1425 = vpop.permute.xlu0 %1424
    %1426 = vrot.lane.b32.xlu0 %v1419, 32
    %v1427 = vpop.permute.xlu0 %1426
    %v1428 = vmul.f32 %v1423, %v1272
    %v1429 = vmul.f32 %v1421, %v1425
    %v1430 = vadd.f32 %v1428, %v1429
    %v1431 = vtanh.pop %v1430
    %v1432 = vmul.f32 %v1427, %v1431
    %1433 = vmatprep.subr.bf16.mxu0 0
    %1434 = vmatpush1.bf16.msra.mxu0 %v349
    %1435 = vmatprep.subr.bf16.mxu0 0
    %1436 = vmatpush1.bf16.msra.mxu0 %v348
    %1437 = vmatprep.subr.bf16.mxu0 0
    %1438 = vmatpush1.bf16.msra.mxu0 %v347
    %1439 = vmatprep.subr.bf16.mxu0 0
    %1440 = vmatpush1.bf16.msra.mxu0 %v346
    %1441 = vmatprep.subr.bf16.mxu0 0
    %1442 = vmatpush1.bf16.msra.mxu0 %v345
    %1443 = vmatprep.subr.bf16.mxu0 0
    %1444 = vmatpush1.bf16.msra.mxu0 %v344
    %1445 = vmatprep.subr.bf16.mxu0 0
    %1446 = vmatpush1.bf16.msra.mxu0 %v343
    %1447 = vmatprep.subr.bf16.mxu0 0
    %1448 = vmatpush1.bf16.msra.mxu0 %v342
    %1449 = vmatprep.subr.bf16.mxu0 0
    %1450 = vmatpush2.bf16.msra.mxu0 0
    %1451 = vmatprep.subr.bf16.mxu0 0
    %1452 = vmatpush2.bf16.msra.mxu0 0
    %1453 = vmatprep.subr.bf16.mxu0 0
    %1454 = vmatpush2.bf16.msra.mxu0 0
    %1455 = vmatprep.subr.bf16.mxu0 0
    %1456 = vmatpush2.bf16.msra.mxu0 0
    %1457 = vmatprep.subr.bf16.mxu0 0
    %1458 = vmatpush2.bf16.msra.mxu0 0
    %1459 = vmatprep.subr.bf16.mxu0 0
    %1460 = vmatpush2.bf16.msra.mxu0 0
    %1461 = vmatprep.subr.bf16.mxu0 0
    %1462 = vmatpush2.bf16.msra.mxu0 0
    %1463 = vmatprep.subr.bf16.mxu0 0
    %1464 = vmatpush2.bf16.msra.mxu0 0
    %1465 = vmatprep.mubr.bf16.mxu0 0
    %1466 = vmatmul.mubr.bf16.gmra.mxu0 %v1374
    %v1467 = vpop.f32.mrf.mxu0
    %v1468 = vadd.f32 0.0, %v1467
    %v1469 = vpop.f32.mrf.mxu0
    %v1470 = vpop.f32.mrf.mxu0
    %v1471 = vpop.f32.mrf.mxu0
    %1472 = vdwg.mxu0
    %v1473 = vadd.f32 %v278, %v1468
    %v1474 = vmul.f32 %v1473, 0.5
    %v1475 = vtanh.pop %v1474
    %v1476 = vmul.f32 %v1475, 0.5
    %v1477 = vadd.f32 %v1476, 0.5
    %v1478 = vtanh.pop %v1473
    %v1479 = vsel %vm293, %v1477, 0.0
    %1480 = vrot.lane.b32.xlu0 %v1477, 96
    %v1481 = vpop.permute.xlu0 %1480
    %1482 = vrot.lane.b32.xlu0 %v1478, 64
    %v1483 = vpop.permute.xlu0 %1482
    %1484 = vrot.lane.b32.xlu0 %v1477, 32
    %v1485 = vpop.permute.xlu0 %1484
    %v1486 = vmul.f32 %v1481, %v1330
    %v1487 = vmul.f32 %v1479, %v1483
    %v1488 = vadd.f32 %v1486, %v1487
    %v1489 = vtanh.pop %v1488
    %v1490 = vmul.f32 %v1485, %v1489
    %v1491 = vpack.c.bf16 %v1432, %v1432
    %1492 = vmatprep.subr.bf16.mxu0 0
    %1493 = vmatpush1.bf16.msra.mxu0 %v471
    %1494 = vmatprep.subr.bf16.mxu0 0
    %1495 = vmatpush1.bf16.msra.mxu0 %v470
    %1496 = vmatprep.subr.bf16.mxu0 0
    %1497 = vmatpush1.bf16.msra.mxu0 %v469
    %1498 = vmatprep.subr.bf16.mxu0 0
    %1499 = vmatpush1.bf16.msra.mxu0 %v468
    %1500 = vmatprep.subr.bf16.mxu0 0
    %1501 = vmatpush1.bf16.msra.mxu0 %v467
    %1502 = vmatprep.subr.bf16.mxu0 0
    %1503 = vmatpush1.bf16.msra.mxu0 %v466
    %1504 = vmatprep.subr.bf16.mxu0 0
    %1505 = vmatpush1.bf16.msra.mxu0 %v465
    %1506 = vmatprep.subr.bf16.mxu0 0
    %1507 = vmatpush1.bf16.msra.mxu0 %v464
    %1508 = vmatprep.subr.bf16.mxu0 0
    %1509 = vmatpush2.bf16.msra.mxu0 0
    %1510 = vmatprep.subr.bf16.mxu0 0
    %1511 = vmatpush2.bf16.msra.mxu0 0
    %1512 = vmatprep.subr.bf16.mxu0 0
    %1513 = vmatpush2.bf16.msra.mxu0 0
    %1514 = vmatprep.subr.bf16.mxu0 0
    %1515 = vmatpush2.bf16.msra.mxu0 0
    %1516 = vmatprep.subr.bf16.mxu0 0
    %1517 = vmatpush2.bf16.msra.mxu0 0
    %1518 = vmatprep.subr.bf16.mxu0 0
    %1519 = vmatpush2.bf16.msra.mxu0 0
    %1520 = vmatprep.subr.bf16.mxu0 0
    %1521 = vmatpush2.bf16.msra.mxu0 0
    %1522 = vmatprep.subr.bf16.mxu0 0
    %1523 = vmatpush2.bf16.msra.mxu0 0
    %1524 = vmatprep.mubr.bf16.mxu0 0
    %1525 = vmatmul.mubr.bf16.gmra.mxu0 %v1491
    %v1526 = vpop.f32.mrf.mxu0
    %v1527 = vadd.f32 0.0, %v1526
    %v1528 = vpop.f32.mrf.mxu0
    %v1529 = vpop.f32.mrf.mxu0
    %v1530 = vpop.f32.mrf.mxu0
    %1531 = vdwg.mxu0
    %v1532 = vpack.c.bf16 %v1490, %v1490
    %1533 = vmatprep.subr.bf16.mxu0 0
    %1534 = vmatpush1.bf16.msra.mxu0 %v576
    %1535 = vmatprep.subr.bf16.mxu0 0
    %1536 = vmatpush1.bf16.msra.mxu0 %v575
    %1537 = vmatprep.subr.bf16.mxu0 0
    %1538 = vmatpush1.bf16.msra.mxu0 %v574
    %1539 = vmatprep.subr.bf16.mxu0 0
    %1540 = vmatpush1.bf16.msra.mxu0 %v573
    %1541 = vmatprep.subr.bf16.mxu0 0
    %1542 = vmatpush1.bf16.msra.mxu0 %v572
    %1543 = vmatprep.subr.bf16.mxu0 0
    %1544 = vmatpush1.bf16.msra.mxu0 %v571
    %1545 = vmatprep.subr.bf16.mxu0 0
    %1546 = vmatpush1.bf16.msra.mxu0 %v570
    %1547 = vmatprep.subr.bf16.mxu0 0
    %1548 = vmatpush1.bf16.msra.mxu0 %v569
    %1549 = vmatprep.subr.bf16.mxu0 0
    %1550 = vmatpush2.bf16.msra.mxu0 0
    %1551 = vmatprep.subr.bf16.mxu0 0
    %1552 = vmatpush2.bf16.msra.mxu0 0
    %1553 = vmatprep.subr.bf16.mxu0 0
    %1554 = vmatpush2.bf16.msra.mxu0 0
    %1555 = vmatprep.subr.bf16.mxu0 0
    %1556 = vmatpush2.bf16.msra.mxu0 0
    %1557 = vmatprep.subr.bf16.mxu0 0
    %1558 = vmatpush2.bf16.msra.mxu0 0
    %1559 = vmatprep.subr.bf16.mxu0 0
    %1560 = vmatpush2.bf16.msra.mxu0 0
    %1561 = vmatprep.subr.bf16.mxu0 0
    %1562 = vmatpush2.bf16.msra.mxu0 0
    %1563 = vmatprep.subr.bf16.mxu0 0
    %1564 = vmatpush2.bf16.msra.mxu0 0
    %1565 = vmatprep.mubr.bf16.mxu0 0
    %1566 = vmatmul.mubr.bf16.gmra.mxu0 %v1532
    %v1567 = vpop.f32.mrf.mxu0
    %v1568 = vadd.f32 %v1527, %v1567
    %v1569 = vpop.f32.mrf.mxu0
    %v1570 = vpop.f32.mrf.mxu0
    %v1571 = vpop.f32.mrf.mxu0
    %1572 = vdwg.mxu0
    %v1573 = vadd.f32 %v1568, %v289
    %v1574 = vmul.f32 %v1573, 0.5
    %v1575 = vtanh.pop %v1574
    %v1576 = vmul.f32 %v1575, 0.5
    %v1577 = vadd.f32 %v1576, 0.5
    %v1578 = vtanh.pop %v1573
    %v1579 = vsel %vm293, %v1577, 0.0
    %1580 = vrot.lane.b32.xlu0 %v1577, 96
    %v1581 = vpop.permute.xlu0 %1580
    %1582 = vrot.lane.b32.xlu0 %v1578, 64
    %v1583 = vpop.permute.xlu0 %1582
    %1584 = vrot.lane.b32.xlu0 %v1577, 32
    %v1585 = vpop.permute.xlu0 %1584
    %v1586 = vmul.f32 %v1581, %v1430
    %v1587 = vmul.f32 %v1579, %v1583
    %v1588 = vadd.f32 %v1586, %v1587
    %v1589 = vtanh.pop %v1588
    %v1590 = vmul.f32 %v1585, %v1589
    %1591 = vmatprep.subr.bf16.mxu0 0
    %1592 = vmatpush1.bf16.msra.mxu0 %v349
    %1593 = vmatprep.subr.bf16.mxu0 0
    %1594 = vmatpush1.bf16.msra.mxu0 %v348
    %1595 = vmatprep.subr.bf16.mxu0 0
    %1596 = vmatpush1.bf16.msra.mxu0 %v347
    %1597 = vmatprep.subr.bf16.mxu0 0
    %1598 = vmatpush1.bf16.msra.mxu0 %v346
    %1599 = vmatprep.subr.bf16.mxu0 0
    %1600 = vmatpush1.bf16.msra.mxu0 %v345
    %1601 = vmatprep.subr.bf16.mxu0 0
    %1602 = vmatpush1.bf16.msra.mxu0 %v344
    %1603 = vmatprep.subr.bf16.mxu0 0
    %1604 = vmatpush1.bf16.msra.mxu0 %v343
    %1605 = vmatprep.subr.bf16.mxu0 0
    %1606 = vmatpush1.bf16.msra.mxu0 %v342
    %1607 = vmatprep.subr.bf16.mxu0 0
    %1608 = vmatpush2.bf16.msra.mxu0 0
    %1609 = vmatprep.subr.bf16.mxu0 0
    %1610 = vmatpush2.bf16.msra.mxu0 0
    %1611 = vmatprep.subr.bf16.mxu0 0
    %1612 = vmatpush2.bf16.msra.mxu0 0
    %1613 = vmatprep.subr.bf16.mxu0 0
    %1614 = vmatpush2.bf16.msra.mxu0 0
    %1615 = vmatprep.subr.bf16.mxu0 0
    %1616 = vmatpush2.bf16.msra.mxu0 0
    %1617 = vmatprep.subr.bf16.mxu0 0
    %1618 = vmatpush2.bf16.msra.mxu0 0
    %1619 = vmatprep.subr.bf16.mxu0 0
    %1620 = vmatpush2.bf16.msra.mxu0 0
    %1621 = vmatprep.subr.bf16.mxu0 0
    %1622 = vmatpush2.bf16.msra.mxu0 0
    %1623 = vmatprep.mubr.bf16.mxu0 0
    %1624 = vmatmul.mubr.bf16.gmra.mxu0 %v1532
    %v1625 = vpop.f32.mrf.mxu0
    %v1626 = vadd.f32 0.0, %v1625
    %v1627 = vpop.f32.mrf.mxu0
    %v1628 = vpop.f32.mrf.mxu0
    %v1629 = vpop.f32.mrf.mxu0
    %1630 = vdwg.mxu0
    %v1631 = vadd.f32 %v281, %v1626
    %v1632 = vmul.f32 %v1631, 0.5
    %v1633 = vtanh.pop %v1632
    %v1634 = vmul.f32 %v1633, 0.5
    %v1635 = vadd.f32 %v1634, 0.5
    %v1636 = vtanh.pop %v1631
    %v1637 = vsel %vm293, %v1635, 0.0
    %1638 = vrot.lane.b32.xlu0 %v1635, 96
    %v1639 = vpop.permute.xlu0 %1638
    %1640 = vrot.lane.b32.xlu0 %v1636, 64
    %v1641 = vpop.permute.xlu0 %1640
    %1642 = vrot.lane.b32.xlu0 %v1635, 32
    %v1643 = vpop.permute.xlu0 %1642
    %v1644 = vmul.f32 %v1639, %v1488
    %v1645 = vmul.f32 %v1637, %v1641
    %v1646 = vadd.f32 %v1644, %v1645
    %v1647 = vtanh.pop %v1646
    %v1648 = vmul.f32 %v1643, %v1647
    %v1649 = vpack.c.bf16 %v1590, %v1590
    %1650 = vmatprep.subr.bf16.mxu0 0
    %1651 = vmatpush1.bf16.msra.mxu0 %v471
    %1652 = vmatprep.subr.bf16.mxu0 0
    %1653 = vmatpush1.bf16.msra.mxu0 %v470
    %1654 = vmatprep.subr.bf16.mxu0 0
    %1655 = vmatpush1.bf16.msra.mxu0 %v469
    %1656 = vmatprep.subr.bf16.mxu0 0
    %1657 = vmatpush1.bf16.msra.mxu0 %v468
    %1658 = vmatprep.subr.bf16.mxu0 0
    %1659 = vmatpush1.bf16.msra.mxu0 %v467
    %1660 = vmatprep.subr.bf16.mxu0 0
    %1661 = vmatpush1.bf16.msra.mxu0 %v466
    %1662 = vmatprep.subr.bf16.mxu0 0
    %1663 = vmatpush1.bf16.msra.mxu0 %v465
    %1664 = vmatprep.subr.bf16.mxu0 0
    %1665 = vmatpush1.bf16.msra.mxu0 %v464
    %1666 = vmatprep.subr.bf16.mxu0 0
    %1667 = vmatpush2.bf16.msra.mxu0 0
    %1668 = vmatprep.subr.bf16.mxu0 0
    %1669 = vmatpush2.bf16.msra.mxu0 0
    %1670 = vmatprep.subr.bf16.mxu0 0
    %1671 = vmatpush2.bf16.msra.mxu0 0
    %1672 = vmatprep.subr.bf16.mxu0 0
    %1673 = vmatpush2.bf16.msra.mxu0 0
    %1674 = vmatprep.subr.bf16.mxu0 0
    %1675 = vmatpush2.bf16.msra.mxu0 0
    %1676 = vmatprep.subr.bf16.mxu0 0
    %1677 = vmatpush2.bf16.msra.mxu0 0
    %1678 = vmatprep.subr.bf16.mxu0 0
    %1679 = vmatpush2.bf16.msra.mxu0 0
    %1680 = vmatprep.subr.bf16.mxu0 0
    %1681 = vmatpush2.bf16.msra.mxu0 0
    %1682 = vmatprep.mubr.bf16.mxu0 0
    %1683 = vmatmul.mubr.bf16.gmra.mxu0 %v1649
    %v1684 = vpop.f32.mrf.mxu0
    %v1685 = vadd.f32 0.0, %v1684
    %v1686 = vpop.f32.mrf.mxu0
    %v1687 = vpop.f32.mrf.mxu0
    %v1688 = vpop.f32.mrf.mxu0
    %1689 = vdwg.mxu0
    %v1690 = vpack.c.bf16 %v1648, %v1648
    %1691 = vmatprep.subr.bf16.mxu0 0
    %1692 = vmatpush1.bf16.msra.mxu0 %v576
    %1693 = vmatprep.subr.bf16.mxu0 0
    %1694 = vmatpush1.bf16.msra.mxu0 %v575
    %1695 = vmatprep.subr.bf16.mxu0 0
    %1696 = vmatpush1.bf16.msra.mxu0 %v574
    %1697 = vmatprep.subr.bf16.mxu0 0
    %1698 = vmatpush1.bf16.msra.mxu0 %v573
    %1699 = vmatprep.subr.bf16.mxu0 0
    %1700 = vmatpush1.bf16.msra.mxu0 %v572
    %1701 = vmatprep.subr.bf16.mxu0 0
    %1702 = vmatpush1.bf16.msra.mxu0 %v571
    %1703 = vmatprep.subr.bf16.mxu0 0
    %1704 = vmatpush1.bf16.msra.mxu0 %v570
    %1705 = vmatprep.subr.bf16.mxu0 0
    %1706 = vmatpush1.bf16.msra.mxu0 %v569
    %1707 = vmatprep.subr.bf16.mxu0 0
    %1708 = vmatpush2.bf16.msra.mxu0 0
    %1709 = vmatprep.subr.bf16.mxu0 0
    %1710 = vmatpush2.bf16.msra.mxu0 0
    %1711 = vmatprep.subr.bf16.mxu0 0
    %1712 = vmatpush2.bf16.msra.mxu0 0
    %1713 = vmatprep.subr.bf16.mxu0 0
    %1714 = vmatpush2.bf16.msra.mxu0 0
    %1715 = vmatprep.subr.bf16.mxu0 0
    %1716 = vmatpush2.bf16.msra.mxu0 0
    %1717 = vmatprep.subr.bf16.mxu0 0
    %1718 = vmatpush2.bf16.msra.mxu0 0
    %1719 = vmatprep.subr.bf16.mxu0 0
    %1720 = vmatpush2.bf16.msra.mxu0 0
    %1721 = vmatprep.subr.bf16.mxu0 0
    %1722 = vmatpush2.bf16.msra.mxu0 0
    %1723 = vmatprep.mubr.bf16.mxu0 0
    %1724 = vmatmul.mubr.bf16.gmra.mxu0 %v1690
    %v1725 = vpop.f32.mrf.mxu0
    %v1726 = vadd.f32 %v1685, %v1725
    %v1727 = vpop.f32.mrf.mxu0
    %v1728 = vpop.f32.mrf.mxu0
    %v1729 = vpop.f32.mrf.mxu0
    %1730 = vdwg.mxu0
    %v1731 = vadd.f32 %v1726, %v289
    %v1732 = vmul.f32 %v1731, 0.5
    %v1733 = vtanh.pop %v1732
    %v1734 = vmul.f32 %v1733, 0.5
    %v1735 = vadd.f32 %v1734, 0.5
    %v1736 = vtanh.pop %v1731
    %v1737 = vsel %vm293, %v1735, 0.0
    %1738 = vrot.lane.b32.xlu0 %v1735, 96
    %v1739 = vpop.permute.xlu0 %1738
    %1740 = vrot.lane.b32.xlu0 %v1736, 64
    %v1741 = vpop.permute.xlu0 %1740
    %1742 = vrot.lane.b32.xlu0 %v1735, 32
    %v1743 = vpop.permute.xlu0 %1742
    %v1744 = vmul.f32 %v1739, %v1588
    %v1745 = vmul.f32 %v1737, %v1741
    %v1746 = vadd.f32 %v1744, %v1745
    %v1747 = vtanh.pop %v1746
    %v1748 = vmul.f32 %v1743, %v1747
    %v1749 = vpack.c.bf16 %v1748, %v1748
    %v1750 = vld [vmem:[#allocation11] sm:$0xf]
    %v1751 = vld [vmem:[#allocation11 + $0x4] sm:$0xf]
    %v1752 = vld [vmem:[#allocation11 + $0x8] sm:$0xf]
    %v1753 = vld [vmem:[#allocation11 + $0xc] sm:$0xf]
    %v1754 = vld [vmem:[#allocation11 + $0x10] sm:$0xf]
    %v1755 = vld [vmem:[#allocation11 + $0x14] sm:$0xf]
    %v1756 = vld [vmem:[#allocation11 + $0x18] sm:$0xf]
    %v1757 = vld [vmem:[#allocation11 + $0x1c] sm:$0xf]
    %v1758 = vld [vmem:[#allocation11 + $0x20] sm:$0xf]
    %v1759 = vld [vmem:[#allocation11 + $0x24] sm:$0xf]
    %v1760 = vld [vmem:[#allocation11 + $0x28] sm:$0xf]
    %v1761 = vld [vmem:[#allocation11 + $0x2c] sm:$0xf]
    %v1762 = vld [vmem:[#allocation11 + $0x30] sm:$0xf]
    %v1763 = vld [vmem:[#allocation11 + $0x34] sm:$0xf]
    %v1764 = vld [vmem:[#allocation11 + $0x38] sm:$0xf]
    %v1765 = vld [vmem:[#allocation11 + $0x3c] sm:$0xf]
    %v1766 = vld [vmem:[%s8] sm:$0x1]
    %v1768 = vlaneseq
    %v1769 = vshrl.u32 %v1768, 7
    %v1770 = vsub.s32 0, %v1769
    %v1771 = vrot.slane %v1766, %v1770
    %v1789 = vunpack.c.l.b16 %v1750
    %v1790 = vunpack.c.l.b16 %v1751
    %v1791 = vunpack.c.l.b16 %v1752
    %v1792 = vunpack.c.l.b16 %v1753
    %v1793 = vunpack.c.l.b16 %v1754
    %v1794 = vunpack.c.l.b16 %v1755
    %v1795 = vunpack.c.l.b16 %v1756
    %v1796 = vunpack.c.l.b16 %v1757
    %v1797 = vunpack.c.l.b16 %v1758
    %v1798 = vunpack.c.l.b16 %v1759
    %v1799 = vunpack.c.l.b16 %v1760
    %v1800 = vunpack.c.l.b16 %v1761
    %v1801 = vunpack.c.l.b16 %v1762
    %v1802 = vunpack.c.l.b16 %v1763
    %v1803 = vunpack.c.l.b16 %v1764
    %v1804 = vunpack.c.l.b16 %v1765
    %v1805 = vpack.c.b16 %v1790, %v1789
    %v1806 = vpack.c.b16 %v1792, %v1791
    %v1807 = vpack.c.b16 %v1794, %v1793
    %v1808 = vpack.c.b16 %v1796, %v1795
    %v1809 = vpack.c.b16 %v1798, %v1797
    %v1810 = vpack.c.b16 %v1800, %v1799
    %v1811 = vpack.c.b16 %v1802, %v1801
    %v1812 = vpack.c.b16 %v1804, %v1803
    %1821 = vmatprep.subr.bf16.mxu0 0
    %1822 = vmatpush1.bf16.msra.mxu0 %v1812
    %1823 = vmatprep.subr.bf16.mxu0 0
    %1824 = vmatpush1.bf16.msra.mxu0 %v1811
    %1825 = vmatprep.subr.bf16.mxu0 0
    %1826 = vmatpush1.bf16.msra.mxu0 %v1810
    %1827 = vmatprep.subr.bf16.mxu0 0
    %1828 = vmatpush1.bf16.msra.mxu0 %v1809
    %1829 = vmatprep.subr.bf16.mxu0 0
    %1830 = vmatpush1.bf16.msra.mxu0 %v1808
    %1831 = vmatprep.subr.bf16.mxu0 0
    %1832 = vmatpush1.bf16.msra.mxu0 %v1807
    %1833 = vmatprep.subr.bf16.mxu0 0
    %1834 = vmatpush1.bf16.msra.mxu0 %v1806
    %1835 = vmatprep.subr.bf16.mxu0 0
    %1836 = vmatpush1.bf16.msra.mxu0 %v1805
    %1837 = vmatprep.subr.bf16.mxu0 0
    %1838 = vmatpush2.bf16.msra.mxu0 0
    %1839 = vmatprep.subr.bf16.mxu0 0
    %1840 = vmatpush2.bf16.msra.mxu0 0
    %1841 = vmatprep.subr.bf16.mxu0 0
    %1842 = vmatpush2.bf16.msra.mxu0 0
    %1843 = vmatprep.subr.bf16.mxu0 0
    %1844 = vmatpush2.bf16.msra.mxu0 0
    %1845 = vmatprep.subr.bf16.mxu0 0
    %1846 = vmatpush2.bf16.msra.mxu0 0
    %1847 = vmatprep.subr.bf16.mxu0 0
    %1848 = vmatpush2.bf16.msra.mxu0 0
    %1849 = vmatprep.subr.bf16.mxu0 0
    %1850 = vmatpush2.bf16.msra.mxu0 0
    %1851 = vmatprep.subr.bf16.mxu0 0
    %1852 = vmatpush2.bf16.msra.mxu0 0
    %1853 = vmatprep.mubr.bf16.mxu0 0
    %1854 = vmatmul.mubr.bf16.gmra.mxu0 %v1749
    %v1855 = vpop.f32.mrf.mxu0
    %v1856 = vadd.f32 %v1771, %v1855
    %v1857 = vpop.f32.mrf.mxu0
    %v1858 = vpop.f32.mrf.mxu0
    %v1859 = vpop.f32.mrf.mxu0
    %1860 = vdwg.mxu0
    %1861 = vst [vmem:[#allocation13] sm:$0xff] %v1856
    // Predicated region
    $region62: #{tpu_custom_call.1} parent=1 // pred_check
      _
    $region63: #{tpu_custom_call.1} parent=1 // pred_check_branch
      %1863 = sbr.rel (0) target = $region65
    $region64: #{tpu_custom_call.1} parent=1 // pred_region
      %s1865 = ssub.s32 128, 128
      %1866 = vsyncadd [#allocation4], %s1865
      %s1868 = sshll.u32 [#allocation13], 4
      %s1869 = int_to_ptr.vmem [resolvable:$true] %s1868
      %1871 = dma.vmem_to_hbm [thread:$0]  %s1869, 128, %s9, [#allocation4]
    $region65: #{tpu_custom_call.1} parent=1 // pred_fallthru
      _
    // Predicated region
    $region66: #{tpu_custom_call.1} parent=1 // pred_check
      _
    $region67: #{tpu_custom_call.1} parent=1 // pred_check_branch
      %1873 = sbr.rel (0) target = $region69
    $region68: #{tpu_custom_call.1} parent=1 // pred_region
      %1874 = dma.done [#allocation4], 128
    $region69: #{tpu_custom_call.1} parent=1 // pred_fallthru
      _
    %1875 = vsyncpa [#allocation3], 1
    %1876 = vsyncpa [#allocation6], 1
    %1877 = vsyncpa [#allocation9], 1
    %1878 = vsyncpa [#allocation12], 1
    %1879 = vsyncpa [#allocation4], 1

</llo_original>
